<compile_context>
chip_gen: v7x
topology: tpu7x:2x2x1
jax: 0.10.0
libtpu: 0.0.40
codegen_flags: <defaults>
</compile_context>

<pallas_src>
import jax
import jax.numpy as jnp
import numpy as np
from jax.experimental import pallas as pl
from jax.experimental.pallas import tpu as pltpu


# ----------------------------------------------------------------------------
# Fused Pallas kernel: whole MHGCN forward pass for one graph-set, in VMEM
# ----------------------------------------------------------------------------
def _mhgcn_kernel(a_ref, x_ref, mask_ref, w1_ref, b1_ref, w2_ref, b2_ref,
                  fc1_ref, fc2_ref, fw1_ref, fw2_ref, fb_ref, o_ref):
    # Per grid step (one graph-set, relations lane-packed along the last axis):
    #   a_ref  : (N, 4N)  [A_0 | A_1 | A_2 | A_3]  normalized adjacencies
    #   x_ref  : (N, 4F)  [X_0 | X_1 | X_2 | X_3]  node features
    #   mask   : (4N, 4H) static block-diagonal ones (propagation selector)
    #   w1_ref : (4F, 4H) block_diag(W1_r),  b1_ref : (1, 4H)
    #   w2_ref : (4H, 4H) block_diag(W2_r),  b2_ref : (1, 4H)
    #   fc1/fc2: (4H, 4)  block-diag attention-score weights (bias dropped,
    #                     it cancels exactly in the relation softmax)
    #   fw1/fw2: (H, C)   split halves of fc_final weight,  fb_ref : (1, C)
    #   o_ref  : (N, C)   per-node log-probabilities
    a_cat = a_ref[...]
    mask = mask_ref[...]
    hdim = fw1_ref.shape[0]

    def gcn_layer(x_cat, w_bd, b_cat):
        # One lane-dense MXU push for all four relation feature transforms ...
        xw = jnp.dot(x_cat, w_bd, preferred_element_type=jnp.float32)      # (N, 4H)
        # ... and one for all four propagations: tile XW down the sublanes and
        # block-mask so output lane-block r only sees A_r @ XW_r.
        xw_bd = jnp.concatenate([xw, xw, xw, xw], axis=0) * mask           # (4N, 4H)
        h = jnp.dot(a_cat, xw_bd, preferred_element_type=jnp.float32) + b_cat
        return jnp.maximum(h, 0.0)                                         # (N, 4H)

    def attn_fuse(slab, fc_bd):
        # Relation-softmax attention over the 4 lane blocks of `slab`.
        scores = jnp.dot(slab, fc_bd, preferred_element_type=jnp.float32)  # (N, 4)
        m = jnp.max(scores, axis=1, keepdims=True)
        e = jnp.exp(scores - m)                                            # EUP
        w = e / jnp.sum(e, axis=1, keepdims=True)                          # (N, 4)
        out = w[:, 0:1] * slab[:, 0:hdim]
        for r in range(1, 4):
            out = out + w[:, r:r + 1] * slab[:, r * hdim:(r + 1) * hdim]
        return out                                                         # (N, H)

    # ---- layer 1 ------------------------------------------------------------
    x1_slab = gcn_layer(x_ref[...], w1_ref[...], b1_ref[...])
    x1 = attn_fuse(x1_slab, fc1_ref[...])
    # ---- layer 2 (consumes the per-relation slab, not the fused x1) ---------
    x2_slab = gcn_layer(x1_slab, w2_ref[...], b2_ref[...])
    x2 = attn_fuse(x2_slab, fc2_ref[...])

    # ---- final classifier + log_softmax (no concat materialized) -----------
    logits = (jnp.dot(x1, fw1_ref[...], preferred_element_type=jnp.float32)
              + jnp.dot(x2, fw2_ref[...], preferred_element_type=jnp.float32)
              + fb_ref[...])
    m = jnp.max(logits, axis=1, keepdims=True)
    lse = jnp.log(jnp.sum(jnp.exp(logits - m), axis=1, keepdims=True)) + m
    o_ref[...] = logits - lse


# ----------------------------------------------------------------------------
# Parameter packing helpers + driver
# ----------------------------------------------------------------------------
def _block_diag(stack):
    """stack: (K, A, B) -> (K*A, K*B) block-diagonal."""
    k, a, b = stack.shape
    out = jnp.zeros((k * a, k * b), stack.dtype)
    for r in range(k):
        out = out.at[r * a:(r + 1) * a, r * b:(r + 1) * b].set(stack[r])
    return out


def _cost_estimate(b, n, f, h, c):
    k = 4
    per = (2 * n * (k * f) * (k * h) + 2 * n * (k * n) * (k * h)   # layer 1
           + 2 * n * (k * h) * (k * h) + 2 * n * (k * n) * (k * h) # layer 2
           + 2 * (2 * n * (k * h) * k)                             # attn scores
           + 2 * (2 * n * h * c)                                   # classifier
           + 12 * n * k * h)                                       # VPU glue
    flops = b * per
    transcendentals = b * (2 * k * n + n * c + n)
    bytes_accessed = 4 * (b * (n * k * n + n * k * f + n * c)
                          + k * n * k * h + k * f * k * h + k * h
                          + k * h * k * h + k * h + 2 * k * h * k
                          + 2 * h * c + c)
    return pl.CostEstimate(flops=flops, transcendentals=transcendentals,
                           bytes_accessed=bytes_accessed)


@jax.jit
def mhgcn_forward(params, x_stack, a_stack):
    """x_stack: (B, 4, N, F), a_stack: (B, 4, N, N) -> (B, N, C) log-probs."""
    bsz, k, n, f = x_stack.shape
    h = params["w1"].shape[2]
    c = params["fcf_w"].shape[1]

    # Lane-pack per-sample inputs: relations along the last (lane) axis.
    x_cat = jnp.transpose(x_stack, (0, 2, 1, 3)).reshape(bsz, n, k * f)
    a_cat = jnp.transpose(a_stack, (0, 2, 1, 3)).reshape(bsz, n, k * n)

    # Pack parameters once (constant block index -> DMA'd a single time).
    w1_bd = _block_diag(params["w1"])                           # (4F, 4H)
    w2_bd = _block_diag(params["w2"])                           # (4H, 4H)
    b1_cat = params["b1"].reshape(1, k * h)
    b2_cat = params["b2"].reshape(1, k * h)
    fc1_bd = _block_diag(jnp.broadcast_to(params["fc1_w"].reshape(1, h, 1),
                                          (k, h, 1)))           # (4H, 4)
    fc2_bd = _block_diag(jnp.broadcast_to(params["fc2_w"].reshape(1, h, 1),
                                          (k, h, 1)))           # (4H, 4)
    fcf_w1 = params["fcf_w"][:h]                                # (H, C)
    fcf_w2 = params["fcf_w"][h:]                                # (H, C)
    fcf_b = params["fcf_b"]                                     # (1, C)
    # Static block-diagonal selector mask for the fused propagation matmul.
    mask = (jnp.arange(k * n)[:, None] // n
            == jnp.arange(k * h)[None, :] // h).astype(jnp.float32)
    # NOTE: fc1_b / fc2_b cancel in the relation softmax and are not passed.

    sample_map = lambda i: (i, 0, 0)
    param_map = lambda i: (0, 0)

    return pl.pallas_call(
        _mhgcn_kernel,
        out_shape=jax.ShapeDtypeStruct((bsz, n, c), jnp.float32),
        grid=(bsz,),
        in_specs=[
            pl.BlockSpec((None, n, k * n), sample_map),   # a_cat  (per sample)
            pl.BlockSpec((None, n, k * f), sample_map),   # x_cat  (per sample)
            pl.BlockSpec((k * n, k * h), param_map),      # mask
            pl.BlockSpec((k * f, k * h), param_map),      # w1_bd
            pl.BlockSpec((1, k * h), param_map),          # b1_cat
            pl.BlockSpec((k * h, k * h), param_map),      # w2_bd
            pl.BlockSpec((1, k * h), param_map),          # b2_cat
            pl.BlockSpec((k * h, k), param_map),          # fc1_bd
            pl.BlockSpec((k * h, k), param_map),          # fc2_bd
            pl.BlockSpec((h, c), param_map),              # fcf_w1
            pl.BlockSpec((h, c), param_map),              # fcf_w2
            pl.BlockSpec((1, c), param_map),              # fcf_b
        ],
        out_specs=pl.BlockSpec((None, n, c), sample_map),
        compiler_params=pltpu.CompilerParams(
            dimension_semantics=("parallel",)),
        cost_estimate=_cost_estimate(bsz, n, f, h, c),
    )(a_cat, x_cat, mask, w1_bd, b1_cat, w2_bd, b2_cat,
      fc1_bd, fc2_bd, fcf_w1, fcf_w2, fcf_b)


# ----------------------------------------------------------------------------
# Pure-JAX reference (per graph-set, for correctness checking)
# ----------------------------------------------------------------------------
def mhgcn_reference(params, x_stack, a_stack):
    def conv(a, x, w, b):
        return jax.nn.relu(a @ (x @ w) + b)

    def fuse(stack, w_row, b):
        scores = jnp.sum(stack * w_row[None], axis=-1, keepdims=True) + b  # (4,N,1)
        attn = jax.nn.softmax(scores, axis=0)
        return jnp.sum(attn * stack, axis=0)

    x1s = [conv(a_stack[r], x_stack[r], params["w1"][r], params["b1"][r])
           for r in range(4)]
    x1 = fuse(jnp.stack(x1s, 0), params["fc1_w"], params["fc1_b"])
    x2s = [conv(a_stack[r], x1s[r], params["w2"][r], params["b2"][r])
           for r in range(4)]
    x2 = fuse(jnp.stack(x2s, 0), params["fc2_w"], params["fc2_b"])
    logits = jnp.concatenate([x1, x2], 1) @ params["fcf_w"] + params["fcf_b"]
    return jax.nn.log_softmax(logits, axis=1)


# ----------------------------------------------------------------------------
# Glue: GCN normalization (dense adjacency from edge_index), parameter init
# ----------------------------------------------------------------------------
def gcn_norm_dense(edge_index, num_nodes):
    """D^{-1/2} (A + I) D^{-1/2} as a dense [N, N] float32 matrix.

    Note: duplicate edges collapse via .set(); the test graphs below have no
    pre-existing self-loops, matching PyG gcn_norm behavior.
    """
    src, dst = edge_index
    a = jnp.zeros((num_nodes, num_nodes), jnp.float32)
    a = a.at[src, dst].set(1.0)
    a = a + jnp.eye(num_nodes, dtype=jnp.float32)        # add self-loops
    deg = jnp.sum(a, axis=1)
    dinv = jnp.where(deg > 0, 1.0 / jnp.sqrt(deg), 0.0)
    return dinv[:, None] * a * dinv[None, :]


def init_params(key, num_features, hidden, out_channels):
    keys = jax.random.split(key, 16)
    kit = iter(keys)

    def mat(shape):
        return (0.1 * jax.random.normal(next(kit), shape)).astype(jnp.float32)

    p = {}
    p["w1"] = mat((4, num_features, hidden))
    p["b1"] = mat((4, 1, hidden))
    p["w2"] = mat((4, hidden, hidden))
    p["b2"] = mat((4, 1, hidden))
    p["fc1_w"] = mat((1, hidden)); p["fc1_b"] = mat(())
    p["fc2_w"] = mat((1, hidden)); p["fc2_b"] = mat(())
    p["fcf_w"] = mat((2 * hidden, out_channels))
    p["fcf_b"] = mat((1, out_channels))
    return p


# ----------------------------------------------------------------------------
# Main
# ----------------------------------------------------------------------------
if __name__ == "__main__":
    N = 16            # nodes per graph
    F = 8             # num_features
    H = 32            # hidden_channels
    C = 4             # out_channels
    B = 8             # batch of independent graph-sets (4 relation graphs each)

    key = jax.random.PRNGKey(0)
    k_feat, k_param = jax.random.split(key, 2)

    params = init_params(k_param, F, H, C)

    # Per-sample node features + deterministic ring edges per relation.
    x_stack = jax.random.normal(k_feat, (B, 4, N, F), dtype=jnp.float32)
    a_samples = []
    for s in range(B):
        rel = []
        for r in range(4):
            src = np.arange(N)
            dst = (src + r + 1 + s) % N          # shift in [1, 11] -> no self-loops
            edge_index = jnp.asarray(
                np.stack([np.concatenate([src, dst]), np.concatenate([dst, src])]),
                dtype=jnp.int32)
            rel.append(gcn_norm_dense(edge_index, N))
        a_samples.append(jnp.stack(rel, axis=0))
    a_stack = jnp.stack(a_samples, axis=0)       # (B, 4, N, N)

    out = mhgcn_forward(params, x_stack, a_stack)
    out = jax.block_until_ready(out)

    ref = jax.vmap(lambda xs, As: mhgcn_reference(params, xs, As))(x_stack, a_stack)
    np.testing.assert_allclose(np.asarray(out), np.asarray(ref),
                               rtol=1e-4, atol=1e-4)

    print("KERNEL_OK")
</pallas_src>

<mosaic_0001>
module attributes {stable_mosaic.version = 11 : i64} {
  func.func @_mhgcn_kernel(%arg0: i32, %arg1: memref<1x16x64xf32, #tpu.memory_space<vmem>>, %arg2: memref<1x16x32xf32, #tpu.memory_space<vmem>>, %arg3: memref<64x128xf32, #tpu.memory_space<vmem>>, %arg4: memref<32x128xf32, #tpu.memory_space<vmem>>, %arg5: memref<1x128xf32, #tpu.memory_space<vmem>>, %arg6: memref<128x128xf32, #tpu.memory_space<vmem>>, %arg7: memref<1x128xf32, #tpu.memory_space<vmem>>, %arg8: memref<128x4xf32, #tpu.memory_space<vmem>>, %arg9: memref<128x4xf32, #tpu.memory_space<vmem>>, %arg10: memref<32x4xf32, #tpu.memory_space<vmem>>, %arg11: memref<32x4xf32, #tpu.memory_space<vmem>>, %arg12: memref<1x4xf32, #tpu.memory_space<vmem>>, %arg13: memref<1x16x4xf32, #tpu.memory_space<vmem>>) attributes {dimension_semantics = [#tpu.dimension_semantics<parallel>], iteration_bounds = array<i64: 8>, scalar_prefetch = 0 : i64, scratch_operands = 0 : i64, tpu.core_type = #tpu.core_type<tc>, window_params = [{transform_indices = @transform_0, window_bounds = array<i64: 1, 16, 64>}, {transform_indices = @transform_1, window_bounds = array<i64: 1, 16, 32>}, {pipeline_mode = #tpu.pipeline_mode<synchronous>, transform_indices = @transform_2, window_bounds = array<i64: 64, 128>}, {pipeline_mode = #tpu.pipeline_mode<synchronous>, transform_indices = @transform_3, window_bounds = array<i64: 32, 128>}, {pipeline_mode = #tpu.pipeline_mode<synchronous>, transform_indices = @transform_4, window_bounds = array<i64: 1, 128>}, {pipeline_mode = #tpu.pipeline_mode<synchronous>, transform_indices = @transform_5, window_bounds = array<i64: 128, 128>}, {pipeline_mode = #tpu.pipeline_mode<synchronous>, transform_indices = @transform_6, window_bounds = array<i64: 1, 128>}, {pipeline_mode = #tpu.pipeline_mode<synchronous>, transform_indices = @transform_7, window_bounds = array<i64: 128, 4>}, {pipeline_mode = #tpu.pipeline_mode<synchronous>, transform_indices = @transform_8, window_bounds = array<i64: 128, 4>}, {pipeline_mode = #tpu.pipeline_mode<synchronous>, transform_indices = @transform_9, window_bounds = array<i64: 32, 4>}, {pipeline_mode = #tpu.pipeline_mode<synchronous>, transform_indices = @transform_10, window_bounds = array<i64: 32, 4>}, {pipeline_mode = #tpu.pipeline_mode<synchronous>, transform_indices = @transform_11, window_bounds = array<i64: 1, 4>}, {transform_indices = @transform_12, window_bounds = array<i64: 1, 16, 4>}]} {
    %c0 = arith.constant 0 : index
    %c0_0 = arith.constant 0 : index
    %c0_1 = arith.constant 0 : index
    %0 = vector.load %arg1[%c0, %c0_0, %c0_1] : memref<1x16x64xf32, #tpu.memory_space<vmem>>, vector<1x16x64xf32>
    %1 = vector.shape_cast %0 : vector<1x16x64xf32> to vector<16x64xf32>
    %c0_2 = arith.constant 0 : index
    %c0_3 = arith.constant 0 : index
    %2 = vector.load %arg3[%c0_2, %c0_3] : memref<64x128xf32, #tpu.memory_space<vmem>>, vector<64x128xf32>
    %c0_4 = arith.constant 0 : index
    %c0_5 = arith.constant 0 : index
    %c0_6 = arith.constant 0 : index
    %3 = vector.load %arg2[%c0_4, %c0_5, %c0_6] : memref<1x16x32xf32, #tpu.memory_space<vmem>>, vector<1x16x32xf32>
    %4 = vector.shape_cast %3 : vector<1x16x32xf32> to vector<16x32xf32>
    %c0_7 = arith.constant 0 : index
    %c0_8 = arith.constant 0 : index
    %5 = vector.load %arg4[%c0_7, %c0_8] : memref<32x128xf32, #tpu.memory_space<vmem>>, vector<32x128xf32>
    %c0_9 = arith.constant 0 : index
    %c0_10 = arith.constant 0 : index
    %6 = vector.load %arg5[%c0_9, %c0_10] : memref<1x128xf32, #tpu.memory_space<vmem>>, vector<1x128xf32>
    %cst = arith.constant dense<0.000000e+00> : vector<16x128xf32>
    %7 = tpu.matmul %4, %5, %cst {dimension_numbers = #tpu.dot_dimension_numbers<[1], [0], [0], [1], [0, 0, 1, 1], [], []>} : vector<16x32xf32>, vector<32x128xf32>, vector<16x128xf32> -> vector<16x128xf32>
    %8 = tpu.concatenate %7, %7, %7, %7 in 0 : vector<16x128xf32>, vector<16x128xf32>, vector<16x128xf32>, vector<16x128xf32> -> vector<64x128xf32>
    %9 = arith.mulf %8, %2 : vector<64x128xf32>
    %cst_11 = arith.constant dense<0.000000e+00> : vector<16x128xf32>
    %10 = tpu.matmul %1, %9, %cst_11 {dimension_numbers = #tpu.dot_dimension_numbers<[1], [0], [0], [1], [0, 0, 1, 1], [], []>} : vector<16x64xf32>, vector<64x128xf32>, vector<16x128xf32> -> vector<16x128xf32>
    %11 = vector.broadcast %6 : vector<1x128xf32> to vector<16x128xf32>
    %12 = arith.addf %10, %11 : vector<16x128xf32>
    %cst_12 = arith.constant 0.000000e+00 : f32
    %13 = vector.broadcast %cst_12 : f32 to vector<16x128xf32>
    %14 = arith.maximumf %12, %13 : vector<16x128xf32>
    %c0_13 = arith.constant 0 : index
    %c0_14 = arith.constant 0 : index
    %15 = vector.load %arg8[%c0_13, %c0_14] : memref<128x4xf32, #tpu.memory_space<vmem>>, vector<128x4xf32>
    %cst_15 = arith.constant dense<0.000000e+00> : vector<16x4xf32>
    %16 = tpu.matmul %14, %15, %cst_15 {dimension_numbers = #tpu.dot_dimension_numbers<[1], [0], [0], [1], [0, 0, 1, 1], [], []>} : vector<16x128xf32>, vector<128x4xf32>, vector<16x4xf32> -> vector<16x4xf32>
    %cst_16 = arith.constant dense<0xFF800000> : vector<16xf32>
    %17 = vector.multi_reduction <maximumf>, %16, %cst_16 [1] : vector<16x4xf32> to vector<16xf32>
    %18 = vector.shape_cast %17 : vector<16xf32> to vector<16x1xf32>
    %19 = vector.broadcast %18 : vector<16x1xf32> to vector<16x4xf32>
    %20 = arith.subf %16, %19 : vector<16x4xf32>
    %21 = math.exp %20 : vector<16x4xf32>
    %cst_17 = arith.constant dense<0.000000e+00> : vector<16xf32>
    %22 = vector.multi_reduction <add>, %21, %cst_17 [1] : vector<16x4xf32> to vector<16xf32>
    %23 = vector.shape_cast %22 : vector<16xf32> to vector<16x1xf32>
    %24 = vector.broadcast %23 : vector<16x1xf32> to vector<16x4xf32>
    %25 = arith.divf %21, %24 : vector<16x4xf32>
    %26 = vector.extract_strided_slice %25 {offsets = [0, 0], sizes = [16, 1], strides = [1, 1]} : vector<16x4xf32> to vector<16x1xf32>
    %27 = vector.extract_strided_slice %14 {offsets = [0, 0], sizes = [16, 32], strides = [1, 1]} : vector<16x128xf32> to vector<16x32xf32>
    %28 = vector.broadcast %26 : vector<16x1xf32> to vector<16x32xf32>
    %29 = arith.mulf %28, %27 : vector<16x32xf32>
    %30 = vector.extract_strided_slice %25 {offsets = [0, 1], sizes = [16, 1], strides = [1, 1]} : vector<16x4xf32> to vector<16x1xf32>
    %31 = vector.extract_strided_slice %14 {offsets = [0, 32], sizes = [16, 32], strides = [1, 1]} : vector<16x128xf32> to vector<16x32xf32>
    %32 = vector.broadcast %30 : vector<16x1xf32> to vector<16x32xf32>
    %33 = arith.mulf %32, %31 : vector<16x32xf32>
    %34 = arith.addf %29, %33 : vector<16x32xf32>
    %35 = vector.extract_strided_slice %25 {offsets = [0, 2], sizes = [16, 1], strides = [1, 1]} : vector<16x4xf32> to vector<16x1xf32>
    %36 = vector.extract_strided_slice %14 {offsets = [0, 64], sizes = [16, 32], strides = [1, 1]} : vector<16x128xf32> to vector<16x32xf32>
    %37 = vector.broadcast %35 : vector<16x1xf32> to vector<16x32xf32>
    %38 = arith.mulf %37, %36 : vector<16x32xf32>
    %39 = arith.addf %34, %38 : vector<16x32xf32>
    %40 = vector.extract_strided_slice %25 {offsets = [0, 3], sizes = [16, 1], strides = [1, 1]} : vector<16x4xf32> to vector<16x1xf32>
    %41 = vector.extract_strided_slice %14 {offsets = [0, 96], sizes = [16, 32], strides = [1, 1]} : vector<16x128xf32> to vector<16x32xf32>
    %42 = vector.broadcast %40 : vector<16x1xf32> to vector<16x32xf32>
    %43 = arith.mulf %42, %41 : vector<16x32xf32>
    %44 = arith.addf %39, %43 : vector<16x32xf32>
    %c0_18 = arith.constant 0 : index
    %c0_19 = arith.constant 0 : index
    %45 = vector.load %arg6[%c0_18, %c0_19] : memref<128x128xf32, #tpu.memory_space<vmem>>, vector<128x128xf32>
    %c0_20 = arith.constant 0 : index
    %c0_21 = arith.constant 0 : index
    %46 = vector.load %arg7[%c0_20, %c0_21] : memref<1x128xf32, #tpu.memory_space<vmem>>, vector<1x128xf32>
    %cst_22 = arith.constant dense<0.000000e+00> : vector<16x128xf32>
    %47 = tpu.matmul %14, %45, %cst_22 {dimension_numbers = #tpu.dot_dimension_numbers<[1], [0], [0], [1], [0, 0, 1, 1], [], []>} : vector<16x128xf32>, vector<128x128xf32>, vector<16x128xf32> -> vector<16x128xf32>
    %48 = tpu.concatenate %47, %47, %47, %47 in 0 : vector<16x128xf32>, vector<16x128xf32>, vector<16x128xf32>, vector<16x128xf32> -> vector<64x128xf32>
    %49 = arith.mulf %48, %2 : vector<64x128xf32>
    %cst_23 = arith.constant dense<0.000000e+00> : vector<16x128xf32>
    %50 = tpu.matmul %1, %49, %cst_23 {dimension_numbers = #tpu.dot_dimension_numbers<[1], [0], [0], [1], [0, 0, 1, 1], [], []>} : vector<16x64xf32>, vector<64x128xf32>, vector<16x128xf32> -> vector<16x128xf32>
    %51 = vector.broadcast %46 : vector<1x128xf32> to vector<16x128xf32>
    %52 = arith.addf %50, %51 : vector<16x128xf32>
    %cst_24 = arith.constant 0.000000e+00 : f32
    %53 = vector.broadcast %cst_24 : f32 to vector<16x128xf32>
    %54 = arith.maximumf %52, %53 : vector<16x128xf32>
    %c0_25 = arith.constant 0 : index
    %c0_26 = arith.constant 0 : index
    %55 = vector.load %arg9[%c0_25, %c0_26] : memref<128x4xf32, #tpu.memory_space<vmem>>, vector<128x4xf32>
    %cst_27 = arith.constant dense<0.000000e+00> : vector<16x4xf32>
    %56 = tpu.matmul %54, %55, %cst_27 {dimension_numbers = #tpu.dot_dimension_numbers<[1], [0], [0], [1], [0, 0, 1, 1], [], []>} : vector<16x128xf32>, vector<128x4xf32>, vector<16x4xf32> -> vector<16x4xf32>
    %cst_28 = arith.constant dense<0xFF800000> : vector<16xf32>
    %57 = vector.multi_reduction <maximumf>, %56, %cst_28 [1] : vector<16x4xf32> to vector<16xf32>
    %58 = vector.shape_cast %57 : vector<16xf32> to vector<16x1xf32>
    %59 = vector.broadcast %58 : vector<16x1xf32> to vector<16x4xf32>
    %60 = arith.subf %56, %59 : vector<16x4xf32>
    %61 = math.exp %60 : vector<16x4xf32>
    %cst_29 = arith.constant dense<0.000000e+00> : vector<16xf32>
    %62 = vector.multi_reduction <add>, %61, %cst_29 [1] : vector<16x4xf32> to vector<16xf32>
    %63 = vector.shape_cast %62 : vector<16xf32> to vector<16x1xf32>
    %64 = vector.broadcast %63 : vector<16x1xf32> to vector<16x4xf32>
    %65 = arith.divf %61, %64 : vector<16x4xf32>
    %66 = vector.extract_strided_slice %65 {offsets = [0, 0], sizes = [16, 1], strides = [1, 1]} : vector<16x4xf32> to vector<16x1xf32>
    %67 = vector.extract_strided_slice %54 {offsets = [0, 0], sizes = [16, 32], strides = [1, 1]} : vector<16x128xf32> to vector<16x32xf32>
    %68 = vector.broadcast %66 : vector<16x1xf32> to vector<16x32xf32>
    %69 = arith.mulf %68, %67 : vector<16x32xf32>
    %70 = vector.extract_strided_slice %65 {offsets = [0, 1], sizes = [16, 1], strides = [1, 1]} : vector<16x4xf32> to vector<16x1xf32>
    %71 = vector.extract_strided_slice %54 {offsets = [0, 32], sizes = [16, 32], strides = [1, 1]} : vector<16x128xf32> to vector<16x32xf32>
    %72 = vector.broadcast %70 : vector<16x1xf32> to vector<16x32xf32>
    %73 = arith.mulf %72, %71 : vector<16x32xf32>
    %74 = arith.addf %69, %73 : vector<16x32xf32>
    %75 = vector.extract_strided_slice %65 {offsets = [0, 2], sizes = [16, 1], strides = [1, 1]} : vector<16x4xf32> to vector<16x1xf32>
    %76 = vector.extract_strided_slice %54 {offsets = [0, 64], sizes = [16, 32], strides = [1, 1]} : vector<16x128xf32> to vector<16x32xf32>
    %77 = vector.broadcast %75 : vector<16x1xf32> to vector<16x32xf32>
    %78 = arith.mulf %77, %76 : vector<16x32xf32>
    %79 = arith.addf %74, %78 : vector<16x32xf32>
    %80 = vector.extract_strided_slice %65 {offsets = [0, 3], sizes = [16, 1], strides = [1, 1]} : vector<16x4xf32> to vector<16x1xf32>
    %81 = vector.extract_strided_slice %54 {offsets = [0, 96], sizes = [16, 32], strides = [1, 1]} : vector<16x128xf32> to vector<16x32xf32>
    %82 = vector.broadcast %80 : vector<16x1xf32> to vector<16x32xf32>
    %83 = arith.mulf %82, %81 : vector<16x32xf32>
    %84 = arith.addf %79, %83 : vector<16x32xf32>
    %c0_30 = arith.constant 0 : index
    %c0_31 = arith.constant 0 : index
    %85 = vector.load %arg10[%c0_30, %c0_31] : memref<32x4xf32, #tpu.memory_space<vmem>>, vector<32x4xf32>
    %cst_32 = arith.constant dense<0.000000e+00> : vector<16x4xf32>
    %86 = tpu.matmul %44, %85, %cst_32 {dimension_numbers = #tpu.dot_dimension_numbers<[1], [0], [0], [1], [0, 0, 1, 1], [], []>} : vector<16x32xf32>, vector<32x4xf32>, vector<16x4xf32> -> vector<16x4xf32>
    %c0_33 = arith.constant 0 : index
    %c0_34 = arith.constant 0 : index
    %87 = vector.load %arg11[%c0_33, %c0_34] : memref<32x4xf32, #tpu.memory_space<vmem>>, vector<32x4xf32>
    %cst_35 = arith.constant dense<0.000000e+00> : vector<16x4xf32>
    %88 = tpu.matmul %84, %87, %cst_35 {dimension_numbers = #tpu.dot_dimension_numbers<[1], [0], [0], [1], [0, 0, 1, 1], [], []>} : vector<16x32xf32>, vector<32x4xf32>, vector<16x4xf32> -> vector<16x4xf32>
    %89 = arith.addf %86, %88 : vector<16x4xf32>
    %c0_36 = arith.constant 0 : index
    %c0_37 = arith.constant 0 : index
    %90 = vector.load %arg12[%c0_36, %c0_37] : memref<1x4xf32, #tpu.memory_space<vmem>>, vector<1x4xf32>
    %91 = vector.broadcast %90 : vector<1x4xf32> to vector<16x4xf32>
    %92 = arith.addf %89, %91 : vector<16x4xf32>
    %cst_38 = arith.constant dense<0xFF800000> : vector<16xf32>
    %93 = vector.multi_reduction <maximumf>, %92, %cst_38 [1] : vector<16x4xf32> to vector<16xf32>
    %94 = vector.shape_cast %93 : vector<16xf32> to vector<16x1xf32>
    %95 = vector.broadcast %94 : vector<16x1xf32> to vector<16x4xf32>
    %96 = arith.subf %92, %95 : vector<16x4xf32>
    %97 = math.exp %96 : vector<16x4xf32>
    %cst_39 = arith.constant dense<0.000000e+00> : vector<16xf32>
    %98 = vector.multi_reduction <add>, %97, %cst_39 [1] : vector<16x4xf32> to vector<16xf32>
    %99 = vector.shape_cast %98 : vector<16xf32> to vector<16x1xf32>
    %100 = math.log %99 : vector<16x1xf32>
    %101 = arith.addf %100, %94 : vector<16x1xf32>
    %102 = vector.broadcast %101 : vector<16x1xf32> to vector<16x4xf32>
    %103 = arith.subf %92, %102 : vector<16x4xf32>
    %c0_40 = arith.constant 0 : index
    %c0_41 = arith.constant 0 : index
    %c0_42 = arith.constant 0 : index
    %104 = vector.load %arg13[%c0_40, %c0_41, %c0_42] : memref<1x16x4xf32, #tpu.memory_space<vmem>>, vector<1x16x4xf32>
    %105 = vector.shape_cast %104 : vector<1x16x4xf32> to vector<16x4xf32>
    %106 = vector.shape_cast %103 : vector<16x4xf32> to vector<1x16x4xf32>
    tpu.vector_store %arg13[%c0_40, %c0_41, %c0_42], %106 {strides = array<i32>} : memref<1x16x4xf32, #tpu.memory_space<vmem>>, vector<1x16x4xf32>,
    return
  }
  func.func @transform_0(%arg0: i32) -> (i32, i32, i32) {
    %c0_i32 = arith.constant 0 : i32
    %c0_i32_0 = arith.constant 0 : i32
    %c0_i32_1 = arith.constant 0 : i32
    return %arg0, %c0_i32, %c0_i32_0 : i32, i32, i32
  }
  func.func @transform_1(%arg0: i32) -> (i32, i32, i32) {
    %c0_i32 = arith.constant 0 : i32
    %c0_i32_0 = arith.constant 0 : i32
    %c0_i32_1 = arith.constant 0 : i32
    return %arg0, %c0_i32, %c0_i32_0 : i32, i32, i32
  }
  func.func @transform_2(%arg0: i32) -> (i32, i32) {
    %c0_i32 = arith.constant 0 : i32
    %c0_i32_0 = arith.constant 0 : i32
    %c0_i32_1 = arith.constant 0 : i32
    return %c0_i32, %c0_i32_0 : i32, i32
  }
  func.func @transform_3(%arg0: i32) -> (i32, i32) {
    %c0_i32 = arith.constant 0 : i32
    %c0_i32_0 = arith.constant 0 : i32
    %c0_i32_1 = arith.constant 0 : i32
    return %c0_i32, %c0_i32_0 : i32, i32
  }
  func.func @transform_4(%arg0: i32) -> (i32, i32) {
    %c0_i32 = arith.constant 0 : i32
    %c0_i32_0 = arith.constant 0 : i32
    %c0_i32_1 = arith.constant 0 : i32
    return %c0_i32, %c0_i32_0 : i32, i32
  }
  func.func @transform_5(%arg0: i32) -> (i32, i32) {
    %c0_i32 = arith.constant 0 : i32
    %c0_i32_0 = arith.constant 0 : i32
    %c0_i32_1 = arith.constant 0 : i32
    return %c0_i32, %c0_i32_0 : i32, i32
  }
  func.func @transform_6(%arg0: i32) -> (i32, i32) {
    %c0_i32 = arith.constant 0 : i32
    %c0_i32_0 = arith.constant 0 : i32
    %c0_i32_1 = arith.constant 0 : i32
    return %c0_i32, %c0_i32_0 : i32, i32
  }
  func.func @transform_7(%arg0: i32) -> (i32, i32) {
    %c0_i32 = arith.constant 0 : i32
    %c0_i32_0 = arith.constant 0 : i32
    %c0_i32_1 = arith.constant 0 : i32
    return %c0_i32, %c0_i32_0 : i32, i32
  }
  func.func @transform_8(%arg0: i32) -> (i32, i32) {
    %c0_i32 = arith.constant 0 : i32
    %c0_i32_0 = arith.constant 0 : i32
    %c0_i32_1 = arith.constant 0 : i32
    return %c0_i32, %c0_i32_0 : i32, i32
  }
  func.func @transform_9(%arg0: i32) -> (i32, i32) {
    %c0_i32 = arith.constant 0 : i32
    %c0_i32_0 = arith.constant 0 : i32
    %c0_i32_1 = arith.constant 0 : i32
    return %c0_i32, %c0_i32_0 : i32, i32
  }
  func.func @transform_10(%arg0: i32) -> (i32, i32) {
    %c0_i32 = arith.constant 0 : i32
    %c0_i32_0 = arith.constant 0 : i32
    %c0_i32_1 = arith.constant 0 : i32
    return %c0_i32, %c0_i32_0 : i32, i32
  }
  func.func @transform_11(%arg0: i32) -> (i32, i32) {
    %c0_i32 = arith.constant 0 : i32
    %c0_i32_0 = arith.constant 0 : i32
    %c0_i32_1 = arith.constant 0 : i32
    return %c0_i32, %c0_i32_0 : i32, i32
  }
  func.func @transform_12(%arg0: i32) -> (i32, i32, i32) {
    %c0_i32 = arith.constant 0 : i32
    %c0_i32_0 = arith.constant 0 : i32
    %c0_i32_1 = arith.constant 0 : i32
    return %arg0, %c0_i32, %c0_i32_0 : i32, i32, i32
  }
}

</mosaic_0001>

<llo_original>
// kernel: mhgcn_forward.1
$region0: #{mhgcn_forward.1}
  #allocation0 [shape = 'u32[]', space=smem, size = 0x4, offset = 0x4, fixed_abs, tag = 'smem constant byte address 0x4 - core index']
  #allocation1 [shape = 'u32[144,128]{1,0:T(1,128)}', space=vmem, size = 0x12000, scoped, tag = 'internal scratch']
  %s0 = inlined_call_operand.vmem [shape: f32[8,16,64], index: 0, kind: input, shape index: {}]
  %s1 = inlined_call_operand.vmem [shape: f32[8,16,32], index: 1, kind: input, shape index: {}]
  %s2 = inlined_call_operand.vmem [shape: f32[64,128], index: 2, kind: input, shape index: {}]
  %s3 = inlined_call_operand.vmem [shape: f32[32,128], index: 3, kind: input, shape index: {}]
  %s4 = inlined_call_operand.vmem [shape: f32[1,128], index: 4, kind: input, shape index: {}]
  %s5 = inlined_call_operand.vmem [shape: f32[128,128], index: 5, kind: input, shape index: {}]
  %s6 = inlined_call_operand.vmem [shape: f32[1,128], index: 6, kind: input, shape index: {}]
  %s7 = inlined_call_operand.vmem [shape: f32[128,4], index: 7, kind: input, shape index: {}]
  %s8 = inlined_call_operand.vmem [shape: f32[128,4], index: 8, kind: input, shape index: {}]
  %s9 = inlined_call_operand.vmem [shape: f32[32,4], index: 9, kind: input, shape index: {}]
  %s10 = inlined_call_operand.vmem [shape: f32[32,4], index: 10, kind: input, shape index: {}]
  %s11 = inlined_call_operand.vmem [shape: f32[1,4], index: 11, kind: input, shape index: {}]
  %s12 = inlined_call_operand.vmem [shape: f32[8,16,4], index: 12, kind: output, shape index: {}]
  %s13 = sld [smem:[#allocation0]]
  $region81: #{mhgcn_forward.1} parent=0
    _
  %s15 = ssub.s32 1, %s13
  %s16 = scalar_select 0, %s15, %s13
  loop: start=0, step=1, limit=10
  $region2: #{mhgcn_forward.1} parent=0 // loop_pre_header
    _
  $region3: #{mhgcn_forward.1} parent=0 // loop_header
    %s18 = sphi 0, %s22
    %p19 = scmp.ge.s32.totalorder %s18, 10
    %s28 = sphi 0, %s30
    %s31 = sphi 0, %s28
    %s32 = sphi 0, %s31
    %s48 = sphi 0, %s32
    %s54 = sphi 0, %s56
    %s57 = sphi 0, %s54
    %s58 = sphi 0, %s57
    %s74 = sphi 0, %s58
    %s78 = sphi 0, %s78
    %s80 = sphi 0, %s78
    %s81 = sphi 0, %s80
    %s95 = sphi 0, %s81
    %s99 = sphi 0, %s99
    %s101 = sphi 0, %s99
    %s102 = sphi 0, %s101
    %s116 = sphi 0, %s102
    %s120 = sphi 0, %s120
    %s122 = sphi 0, %s120
    %s123 = sphi 0, %s122
    %s137 = sphi 0, %s123
    %s141 = sphi 0, %s141
    %s143 = sphi 0, %s141
    %s144 = sphi 0, %s143
    %s158 = sphi 0, %s144
    %s162 = sphi 0, %s162
    %s164 = sphi 0, %s162
    %s165 = sphi 0, %s164
    %s179 = sphi 0, %s165
    %s183 = sphi 0, %s183
    %s185 = sphi 0, %s183
    %s186 = sphi 0, %s185
    %s200 = sphi 0, %s186
    %s204 = sphi 0, %s204
    %s206 = sphi 0, %s204
    %s207 = sphi 0, %s206
    %s221 = sphi 0, %s207
    %s225 = sphi 0, %s225
    %s227 = sphi 0, %s225
    %s228 = sphi 0, %s227
    %s242 = sphi 0, %s228
    %s246 = sphi 0, %s246
    %s248 = sphi 0, %s246
    %s249 = sphi 0, %s248
    %s263 = sphi 0, %s249
    %s267 = sphi 0, %s267
    %s269 = sphi 0, %s267
    %s270 = sphi 0, %s269
    %s284 = sphi 0, %s270
    %s290 = sphi 0, %s292
    %s293 = sphi 0, %s290
    %s294 = sphi 0, %s293
    %s310 = sphi 0, %s294
  $region4: #{mhgcn_forward.1} parent=0 // loop_header_branch
    %21 = sbr.rel (%p19) target = $region8
  $region5: #{mhgcn_forward.1} parent=0 // loop_body
    %s23 = ssub.s32 %s18, 1
    %s24 = ssub.s32 %s18, 2
    %s25 = sadd.s32 %s18, 1
    %s26 = ssub.s32 %s18, %s25
    %p27 = scmp.eq.s32.totalorder %s26, 0
    %s29 = sadd.s32 %s28, 1
    %s30 = scalar_select %p27, %s28, %s29
    %p33 = pneg %p27
    %p34 = scmp.eq.s32.totalorder %s18, 7
    %p35 = por %p33, %p34
    %p36 = scmp.ne.s32.totalorder %s28, %s31
    %p37 = scmp.eq.s32.totalorder %s18, 0
    %p38 = por %p36, %p37
    %p39 = scmp.ne.s32.totalorder %s28, %s31
    %p40 = scmp.eq.s32.totalorder %s23, 7
    %p41 = por %p39, %p40
    %p42 = scmp.ne.s32.totalorder %s31, %s32
    %p43 = scmp.eq.s32.totalorder %s23, 0
    %p44 = por %p42, %p43
    %p45 = scmp.ne.s32.totalorder %s31, %s32
    %p46 = scmp.eq.s32.totalorder %s24, 7
    %p47 = por %p45, %p46
    %p49 = scmp.ne.s32.totalorder %s32, %s48
    %p50 = scmp.eq.s32.totalorder %s24, 0
    %p51 = por %p49, %p50
    %s52 = ssub.s32 %s18, %s25
    %p53 = scmp.eq.s32.totalorder %s52, 0
    %s55 = sadd.s32 %s54, 1
    %s56 = scalar_select %p53, %s54, %s55
    %p59 = pneg %p53
    %p60 = scmp.eq.s32.totalorder %s18, 7
    %p61 = por %p59, %p60
    %p62 = scmp.ne.s32.totalorder %s54, %s57
    %p63 = scmp.eq.s32.totalorder %s18, 0
    %p64 = por %p62, %p63
    %p65 = scmp.ne.s32.totalorder %s54, %s57
    %p66 = scmp.eq.s32.totalorder %s23, 7
    %p67 = por %p65, %p66
    %p68 = scmp.ne.s32.totalorder %s57, %s58
    %p69 = scmp.eq.s32.totalorder %s23, 0
    %p70 = por %p68, %p69
    %p71 = scmp.ne.s32.totalorder %s57, %s58
    %p72 = scmp.eq.s32.totalorder %s24, 7
    %p73 = por %p71, %p72
    %p75 = scmp.ne.s32.totalorder %s58, %s74
    %p76 = scmp.eq.s32.totalorder %s24, 0
    %p77 = por %p75, %p76
    %s79 = sadd.s32 %s78, 1
    %p82 = scmp.eq.s32.totalorder %s18, 7
    %p83 = scmp.ne.s32.totalorder %s78, %s80
    %p84 = scmp.eq.s32.totalorder %s18, 0
    %p85 = por %p83, %p84
    %p86 = scmp.ne.s32.totalorder %s78, %s80
    %p87 = scmp.eq.s32.totalorder %s23, 7
    %p88 = por %p86, %p87
    %p89 = scmp.ne.s32.totalorder %s80, %s81
    %p90 = scmp.eq.s32.totalorder %s23, 0
    %p91 = por %p89, %p90
    %p92 = scmp.ne.s32.totalorder %s80, %s81
    %p93 = scmp.eq.s32.totalorder %s24, 7
    %p94 = por %p92, %p93
    %p96 = scmp.ne.s32.totalorder %s81, %s95
    %p97 = scmp.eq.s32.totalorder %s24, 0
    %p98 = por %p96, %p97
    %s100 = sadd.s32 %s99, 1
    %p103 = scmp.eq.s32.totalorder %s18, 7
    %p104 = scmp.ne.s32.totalorder %s99, %s101
    %p105 = scmp.eq.s32.totalorder %s18, 0
    %p106 = por %p104, %p105
    %p107 = scmp.ne.s32.totalorder %s99, %s101
    %p108 = scmp.eq.s32.totalorder %s23, 7
    %p109 = por %p107, %p108
    %p110 = scmp.ne.s32.totalorder %s101, %s102
    %p111 = scmp.eq.s32.totalorder %s23, 0
    %p112 = por %p110, %p111
    %p113 = scmp.ne.s32.totalorder %s101, %s102
    %p114 = scmp.eq.s32.totalorder %s24, 7
    %p115 = por %p113, %p114
    %p117 = scmp.ne.s32.totalorder %s102, %s116
    %p118 = scmp.eq.s32.totalorder %s24, 0
    %p119 = por %p117, %p118
    %s121 = sadd.s32 %s120, 1
    %p124 = scmp.eq.s32.totalorder %s18, 7
    %p125 = scmp.ne.s32.totalorder %s120, %s122
    %p126 = scmp.eq.s32.totalorder %s18, 0
    %p127 = por %p125, %p126
    %p128 = scmp.ne.s32.totalorder %s120, %s122
    %p129 = scmp.eq.s32.totalorder %s23, 7
    %p130 = por %p128, %p129
    %p131 = scmp.ne.s32.totalorder %s122, %s123
    %p132 = scmp.eq.s32.totalorder %s23, 0
    %p133 = por %p131, %p132
    %p134 = scmp.ne.s32.totalorder %s122, %s123
    %p135 = scmp.eq.s32.totalorder %s24, 7
    %p136 = por %p134, %p135
    %p138 = scmp.ne.s32.totalorder %s123, %s137
    %p139 = scmp.eq.s32.totalorder %s24, 0
    %p140 = por %p138, %p139
    %s142 = sadd.s32 %s141, 1
    %p145 = scmp.eq.s32.totalorder %s18, 7
    %p146 = scmp.ne.s32.totalorder %s141, %s143
    %p147 = scmp.eq.s32.totalorder %s18, 0
    %p148 = por %p146, %p147
    %p149 = scmp.ne.s32.totalorder %s141, %s143
    %p150 = scmp.eq.s32.totalorder %s23, 7
    %p151 = por %p149, %p150
    %p152 = scmp.ne.s32.totalorder %s143, %s144
    %p153 = scmp.eq.s32.totalorder %s23, 0
    %p154 = por %p152, %p153
    %p155 = scmp.ne.s32.totalorder %s143, %s144
    %p156 = scmp.eq.s32.totalorder %s24, 7
    %p157 = por %p155, %p156
    %p159 = scmp.ne.s32.totalorder %s144, %s158
    %p160 = scmp.eq.s32.totalorder %s24, 0
    %p161 = por %p159, %p160
    %s163 = sadd.s32 %s162, 1
    %p166 = scmp.eq.s32.totalorder %s18, 7
    %p167 = scmp.ne.s32.totalorder %s162, %s164
    %p168 = scmp.eq.s32.totalorder %s18, 0
    %p169 = por %p167, %p168
    %p170 = scmp.ne.s32.totalorder %s162, %s164
    %p171 = scmp.eq.s32.totalorder %s23, 7
    %p172 = por %p170, %p171
    %p173 = scmp.ne.s32.totalorder %s164, %s165
    %p174 = scmp.eq.s32.totalorder %s23, 0
    %p175 = por %p173, %p174
    %p176 = scmp.ne.s32.totalorder %s164, %s165
    %p177 = scmp.eq.s32.totalorder %s24, 7
    %p178 = por %p176, %p177
    %p180 = scmp.ne.s32.totalorder %s165, %s179
    %p181 = scmp.eq.s32.totalorder %s24, 0
    %p182 = por %p180, %p181
    %s184 = sadd.s32 %s183, 1
    %p187 = scmp.eq.s32.totalorder %s18, 7
    %p188 = scmp.ne.s32.totalorder %s183, %s185
    %p189 = scmp.eq.s32.totalorder %s18, 0
    %p190 = por %p188, %p189
    %p191 = scmp.ne.s32.totalorder %s183, %s185
    %p192 = scmp.eq.s32.totalorder %s23, 7
    %p193 = por %p191, %p192
    %p194 = scmp.ne.s32.totalorder %s185, %s186
    %p195 = scmp.eq.s32.totalorder %s23, 0
    %p196 = por %p194, %p195
    %p197 = scmp.ne.s32.totalorder %s185, %s186
    %p198 = scmp.eq.s32.totalorder %s24, 7
    %p199 = por %p197, %p198
    %p201 = scmp.ne.s32.totalorder %s186, %s200
    %p202 = scmp.eq.s32.totalorder %s24, 0
    %p203 = por %p201, %p202
    %s205 = sadd.s32 %s204, 1
    %p208 = scmp.eq.s32.totalorder %s18, 7
    %p209 = scmp.ne.s32.totalorder %s204, %s206
    %p210 = scmp.eq.s32.totalorder %s18, 0
    %p211 = por %p209, %p210
    %p212 = scmp.ne.s32.totalorder %s204, %s206
    %p213 = scmp.eq.s32.totalorder %s23, 7
    %p214 = por %p212, %p213
    %p215 = scmp.ne.s32.totalorder %s206, %s207
    %p216 = scmp.eq.s32.totalorder %s23, 0
    %p217 = por %p215, %p216
    %p218 = scmp.ne.s32.totalorder %s206, %s207
    %p219 = scmp.eq.s32.totalorder %s24, 7
    %p220 = por %p218, %p219
    %p222 = scmp.ne.s32.totalorder %s207, %s221
    %p223 = scmp.eq.s32.totalorder %s24, 0
    %p224 = por %p222, %p223
    %s226 = sadd.s32 %s225, 1
    %p229 = scmp.eq.s32.totalorder %s18, 7
    %p230 = scmp.ne.s32.totalorder %s225, %s227
    %p231 = scmp.eq.s32.totalorder %s18, 0
    %p232 = por %p230, %p231
    %p233 = scmp.ne.s32.totalorder %s225, %s227
    %p234 = scmp.eq.s32.totalorder %s23, 7
    %p235 = por %p233, %p234
    %p236 = scmp.ne.s32.totalorder %s227, %s228
    %p237 = scmp.eq.s32.totalorder %s23, 0
    %p238 = por %p236, %p237
    %p239 = scmp.ne.s32.totalorder %s227, %s228
    %p240 = scmp.eq.s32.totalorder %s24, 7
    %p241 = por %p239, %p240
    %p243 = scmp.ne.s32.totalorder %s228, %s242
    %p244 = scmp.eq.s32.totalorder %s24, 0
    %p245 = por %p243, %p244
    %s247 = sadd.s32 %s246, 1
    %p250 = scmp.eq.s32.totalorder %s18, 7
    %p251 = scmp.ne.s32.totalorder %s246, %s248
    %p252 = scmp.eq.s32.totalorder %s18, 0
    %p253 = por %p251, %p252
    %p254 = scmp.ne.s32.totalorder %s246, %s248
    %p255 = scmp.eq.s32.totalorder %s23, 7
    %p256 = por %p254, %p255
    %p257 = scmp.ne.s32.totalorder %s248, %s249
    %p258 = scmp.eq.s32.totalorder %s23, 0
    %p259 = por %p257, %p258
    %p260 = scmp.ne.s32.totalorder %s248, %s249
    %p261 = scmp.eq.s32.totalorder %s24, 7
    %p262 = por %p260, %p261
    %p264 = scmp.ne.s32.totalorder %s249, %s263
    %p265 = scmp.eq.s32.totalorder %s24, 0
    %p266 = por %p264, %p265
    %s268 = sadd.s32 %s267, 1
    %p271 = scmp.eq.s32.totalorder %s18, 7
    %p272 = scmp.ne.s32.totalorder %s267, %s269
    %p273 = scmp.eq.s32.totalorder %s18, 0
    %p274 = por %p272, %p273
    %p275 = scmp.ne.s32.totalorder %s267, %s269
    %p276 = scmp.eq.s32.totalorder %s23, 7
    %p277 = por %p275, %p276
    %p278 = scmp.ne.s32.totalorder %s269, %s270
    %p279 = scmp.eq.s32.totalorder %s23, 0
    %p280 = por %p278, %p279
    %p281 = scmp.ne.s32.totalorder %s269, %s270
    %p282 = scmp.eq.s32.totalorder %s24, 7
    %p283 = por %p281, %p282
    %p285 = scmp.ne.s32.totalorder %s270, %s284
    %p286 = scmp.eq.s32.totalorder %s24, 0
    %p287 = por %p285, %p286
    %s288 = ssub.s32 %s18, %s25
    %p289 = scmp.eq.s32.totalorder %s288, 0
    %s291 = sadd.s32 %s290, 1
    %s292 = scalar_select %p289, %s290, %s291
    %p295 = pneg %p289
    %p296 = scmp.eq.s32.totalorder %s18, 7
    %p297 = por %p295, %p296
    %p298 = scmp.ne.s32.totalorder %s290, %s293
    %p299 = scmp.eq.s32.totalorder %s18, 0
    %p300 = por %p298, %p299
    %p301 = scmp.ne.s32.totalorder %s290, %s293
    %p302 = scmp.eq.s32.totalorder %s23, 7
    %p303 = por %p301, %p302
    %p304 = scmp.ne.s32.totalorder %s293, %s294
    %p305 = scmp.eq.s32.totalorder %s23, 0
    %p306 = por %p304, %p305
    %p307 = scmp.ne.s32.totalorder %s293, %s294
    %p308 = scmp.eq.s32.totalorder %s24, 7
    %p309 = por %p307, %p308
    %p311 = scmp.ne.s32.totalorder %s294, %s310
    %p312 = scmp.eq.s32.totalorder %s24, 0
    %p313 = por %p311, %p312
    %p314 = scmp.le.s32.totalorder 1, %s18
    %p315 = scmp.lt.s32.totalorder %s18, 9
    %p316 = pnand %p314, %p315
    %p317 = pneg %p316
    // Predicated region
    $region9: #{mhgcn_forward.1} parent=5 // pred_check
      _
    $region10: #{mhgcn_forward.1} parent=5 // pred_check_branch
      %319 = sbr.rel (%p316) target = $region12
    $region11: #{mhgcn_forward.1} parent=5 // pred_region
      %s320 = ssub.s32 %s18, 1
      // Predicated region
      $region13: #{mhgcn_forward.1} parent=11 // pred_check
        %p321 = pneg %p91
      $region14: #{mhgcn_forward.1} parent=11 // pred_check_branch
        %323 = sbr.rel (%p321) target = $region16
      $region15: #{mhgcn_forward.1} parent=11 // pred_region
        _
      $region16: #{mhgcn_forward.1} parent=11 // pred_fallthru
        _
      // Predicated region
      $region17: #{mhgcn_forward.1} parent=11 // pred_check
        %p324 = pneg %p112
      $region18: #{mhgcn_forward.1} parent=11 // pred_check_branch
        %326 = sbr.rel (%p324) target = $region20
      $region19: #{mhgcn_forward.1} parent=11 // pred_region
        _
      $region20: #{mhgcn_forward.1} parent=11 // pred_fallthru
        _
      // Predicated region
      $region21: #{mhgcn_forward.1} parent=11 // pred_check
        %p327 = pneg %p133
      $region22: #{mhgcn_forward.1} parent=11 // pred_check_branch
        %329 = sbr.rel (%p327) target = $region24
      $region23: #{mhgcn_forward.1} parent=11 // pred_region
        _
      $region24: #{mhgcn_forward.1} parent=11 // pred_fallthru
        _
      // Predicated region
      $region25: #{mhgcn_forward.1} parent=11 // pred_check
        %p330 = pneg %p154
      $region26: #{mhgcn_forward.1} parent=11 // pred_check_branch
        %332 = sbr.rel (%p330) target = $region28
      $region27: #{mhgcn_forward.1} parent=11 // pred_region
        _
      $region28: #{mhgcn_forward.1} parent=11 // pred_fallthru
        _
      // Predicated region
      $region29: #{mhgcn_forward.1} parent=11 // pred_check
        %p333 = pneg %p175
      $region30: #{mhgcn_forward.1} parent=11 // pred_check_branch
        %335 = sbr.rel (%p333) target = $region32
      $region31: #{mhgcn_forward.1} parent=11 // pred_region
        _
      $region32: #{mhgcn_forward.1} parent=11 // pred_fallthru
        _
      // Predicated region
      $region33: #{mhgcn_forward.1} parent=11 // pred_check
        %p336 = pneg %p196
      $region34: #{mhgcn_forward.1} parent=11 // pred_check_branch
        %338 = sbr.rel (%p336) target = $region36
      $region35: #{mhgcn_forward.1} parent=11 // pred_region
        _
      $region36: #{mhgcn_forward.1} parent=11 // pred_fallthru
        _
      // Predicated region
      $region37: #{mhgcn_forward.1} parent=11 // pred_check
        %p339 = pneg %p217
      $region38: #{mhgcn_forward.1} parent=11 // pred_check_branch
        %341 = sbr.rel (%p339) target = $region40
      $region39: #{mhgcn_forward.1} parent=11 // pred_region
        _
      $region40: #{mhgcn_forward.1} parent=11 // pred_fallthru
        _
      // Predicated region
      $region41: #{mhgcn_forward.1} parent=11 // pred_check
        %p342 = pneg %p238
      $region42: #{mhgcn_forward.1} parent=11 // pred_check_branch
        %344 = sbr.rel (%p342) target = $region44
      $region43: #{mhgcn_forward.1} parent=11 // pred_region
        _
      $region44: #{mhgcn_forward.1} parent=11 // pred_fallthru
        _
      // Predicated region
      $region45: #{mhgcn_forward.1} parent=11 // pred_check
        %p345 = pneg %p259
      $region46: #{mhgcn_forward.1} parent=11 // pred_check_branch
        %347 = sbr.rel (%p345) target = $region48
      $region47: #{mhgcn_forward.1} parent=11 // pred_region
        _
      $region48: #{mhgcn_forward.1} parent=11 // pred_fallthru
        _
      // Predicated region
      $region49: #{mhgcn_forward.1} parent=11 // pred_check
        %p348 = pneg %p280
      $region50: #{mhgcn_forward.1} parent=11 // pred_check_branch
        %350 = sbr.rel (%p348) target = $region52
      $region51: #{mhgcn_forward.1} parent=11 // pred_region
        _
      $region52: #{mhgcn_forward.1} parent=11 // pred_fallthru
        _
    $region12: #{mhgcn_forward.1} parent=5 // pred_fallthru
      _
    %p351 = scmp.lt.s32.totalorder %s18, 8
    // Predicated region
    $region53: #{mhgcn_forward.1} parent=5 // pred_check
      %p352 = pneg %p351
    $region54: #{mhgcn_forward.1} parent=5 // pred_check_branch
      %354 = sbr.rel (%p352) target = $region56
    $region55: #{mhgcn_forward.1} parent=5 // pred_region
      // Predicated region
      $region57: #{mhgcn_forward.1} parent=55 // pred_check
        %p355 = pneg %p38
      $region58: #{mhgcn_forward.1} parent=55 // pred_check_branch
        %357 = sbr.rel (%p355) target = $region60
      $region59: #{mhgcn_forward.1} parent=55 // pred_region
        %p358 = scmp.lt.s32.totalorder %s18, 7
        %s359 = scalar_select %p358, %s18, 7
        %s360 = smul.addr %s359, 2
        %s361 = smul.addr %s360, 8
        %s362 = scalar_lea.vmem %s0, %s361
      $region60: #{mhgcn_forward.1} parent=55 // pred_fallthru
        _
      // Predicated region
      $region61: #{mhgcn_forward.1} parent=55 // pred_check
        %p363 = pneg %p64
      $region62: #{mhgcn_forward.1} parent=55 // pred_check_branch
        %365 = sbr.rel (%p363) target = $region64
      $region63: #{mhgcn_forward.1} parent=55 // pred_region
        %p366 = scmp.lt.s32.totalorder %s18, 7
        %s367 = scalar_select %p366, %s18, 7
        %s368 = smul.addr %s367, 2
        %s369 = smul.addr %s368, 8
        %s370 = scalar_lea.vmem %s1, %s369
      $region64: #{mhgcn_forward.1} parent=55 // pred_fallthru
        _
    $region56: #{mhgcn_forward.1} parent=5 // pred_fallthru
      _
    %p371 = scmp.le.s32.totalorder 1, %s18
    %p372 = scmp.lt.s32.totalorder %s18, 9
    %p373 = pnand %p371, %p372
    %p374 = pneg %p373
    // Predicated region
    $region65: #{mhgcn_forward.1} parent=5 // pred_check
      _
    $region66: #{mhgcn_forward.1} parent=5 // pred_check_branch
      %376 = sbr.rel (%p373) target = $region68
    $region67: #{mhgcn_forward.1} parent=5 // pred_region
      %s377 = ssub.s32 %s18, 1
      %p378 = scmp.lt.s32.totalorder %s23, 7
      %s379 = scalar_select %p378, %s23, 7
      %s380 = smul.addr %s379, 2
      %s381 = smul.addr %s380, 8
      %s382 = scalar_lea.vmem %s0, %s381
      %p383 = pneg %p44
      %p384 = pneg %p41
      %p385 = scmp.lt.s32.totalorder %s23, 7
      %s386 = scalar_select %p385, %s23, 7
      %s387 = smul.addr %s386, 2
      %s388 = smul.addr %s387, 8
      %s389 = scalar_lea.vmem %s1, %s388
      %p390 = pneg %p70
      %p391 = pneg %p67
      %p392 = pneg %p91
      %p393 = pneg %p88
      %p394 = pneg %p112
      %p395 = pneg %p109
      %p396 = pneg %p133
      %p397 = pneg %p130
      %p398 = pneg %p154
      %p399 = pneg %p151
      %p400 = pneg %p175
      %p401 = pneg %p172
      %p402 = pneg %p196
      %p403 = pneg %p193
      %p404 = pneg %p217
      %p405 = pneg %p214
      %p406 = pneg %p238
      %p407 = pneg %p235
      %p408 = pneg %p259
      %p409 = pneg %p256
      %p410 = pneg %p280
      %p411 = pneg %p277
      %p412 = pneg %p306
      %p413 = pneg %p303
      %p414 = scmp.lt.s32.totalorder %s23, 7
      %s415 = scalar_select %p414, %s23, 7
      %s416 = smul.addr %s415, 2
      %s417 = smul.addr %s416, 8
      %s418 = scalar_lea.vmem %s12, %s417
      %p419 = scmp.lt.s32.totalorder %s23, 7
      %s420 = scalar_select %p419, %s23, 7
      %s421 = smul.addr %s420, 2
      %s422 = smul.addr %s421, 8
      %s423 = scalar_lea.vmem %s0, %s422
      %p424 = scmp.lt.s32.totalorder %s23, 7
      %s425 = scalar_select %p424, %s23, 7
      %s426 = smul.addr %s425, 2
      %s427 = smul.addr %s426, 8
      %s428 = scalar_lea.vmem %s1, %s427
      %p429 = scmp.lt.s32.totalorder %s23, 7
      %s430 = scalar_select %p429, %s23, 7
      %s431 = smul.addr %s430, 2
      %s432 = smul.addr %s431, 8
      %s433 = scalar_lea.vmem %s12, %s432
      %v434 = vld [vmem:[%s423] sm:$0xff]
      %v435 = vld [vmem:[%s423 + $0x8] sm:$0xff]
      %v436 = vld [vmem:[%s2] sm:$0xff]
      %v437 = vld [vmem:[%s2 + $0x8] sm:$0xff]
      %v438 = vld [vmem:[%s2 + $0x10] sm:$0xff]
      %v439 = vld [vmem:[%s2 + $0x18] sm:$0xff]
      %v440 = vld [vmem:[%s2 + $0x20] sm:$0xff]
      %v441 = vld [vmem:[%s2 + $0x28] sm:$0xff]
      %v442 = vld [vmem:[%s2 + $0x30] sm:$0xff]
      %v443 = vld [vmem:[%s2 + $0x38] sm:$0xff]
      %v444 = vld [vmem:[%s428] sm:$0xff]
      %v445 = vld [vmem:[%s428 + $0x8] sm:$0xff]
      %v446 = vld [vmem:[%s3] sm:$0xff]
      %v447 = vld [vmem:[%s3 + $0x8] sm:$0xff]
      %v448 = vld [vmem:[%s3 + $0x10] sm:$0xff]
      %v449 = vld [vmem:[%s3 + $0x18] sm:$0xff]
      %v450 = vld [vmem:[%s4] sm:$0x1]
      %vm451 = vcmask 261120
      %v453 = vsel %vm451, %v444, 0
      %v456 = vsel %vm451, %v445, 0
      %458 = vmatprep.subr.mxu0 0.0
      %459 = vmatpush1.msra.mxu0 %v446
      %460 = vmatprep.subr.mxu0 0.0
      %461 = vmatpush1.msra.mxu0 %v447
      %462 = vmatprep.subr.mxu0 0.0
      %463 = vmatpush1.msra.mxu0 %v448
      %464 = vmatprep.subr.mxu0 0.0
      %465 = vmatpush1.msra.mxu0 %v449
      %466 = vmatprep.subr.mxu0 0.0
      %467 = vmatpush1.msra.mxu0 0.0
      %468 = vmatprep.subr.mxu0 0.0
      %469 = vmatpush1.msra.mxu0 0.0
      %470 = vmatprep.subr.mxu0 0.0
      %471 = vmatpush1.msra.mxu0 0.0
      %472 = vmatprep.subr.mxu0 0.0
      %473 = vmatpush1.msra.mxu0 0.0
      %474 = vmatprep.subr.mxu0 0.0
      %475 = vmatpush1.msra.mxu0 0.0
      %476 = vmatprep.subr.mxu0 0.0
      %477 = vmatpush1.msra.mxu0 0.0
      %478 = vmatprep.subr.mxu0 0.0
      %479 = vmatpush1.msra.mxu0 0.0
      %480 = vmatprep.subr.mxu0 0.0
      %481 = vmatpush1.msra.mxu0 0.0
      %482 = vmatprep.subr.mxu0 0.0
      %483 = vmatpush1.msra.mxu0 0.0
      %484 = vmatprep.subr.mxu0 0.0
      %485 = vmatpush1.msra.mxu0 0.0
      %486 = vmatprep.subr.mxu0 0.0
      %487 = vmatpush1.msra.mxu0 0.0
      %488 = vmatprep.subr.mxu0 0.0
      %489 = vmatpush1.msra.mxu0 0.0
      %490 = vmatprep.subr.mxu0 0.0
      %491 = vmatpush1.msra.mxu0 0.0
      %492 = vmatprep.subr.mxu0 0.0
      %493 = vmatpush1.msra.mxu0 0.0
      %494 = vmatprep.subr.mxu0 0.0
      %495 = vmatpush1.msra.mxu0 0.0
      %496 = vmatprep.subr.mxu0 0.0
      %497 = vmatpush1.msra.mxu0 0.0
      %498 = vmatprep.subr.mxu0 0.0
      %499 = vmatpush1.msra.mxu0 0.0
      %500 = vmatprep.subr.mxu0 0.0
      %501 = vmatpush1.msra.mxu0 0.0
      %502 = vmatprep.subr.mxu0 0.0
      %503 = vmatpush1.msra.mxu0 0.0
      %504 = vmatprep.subr.mxu0 0.0
      %505 = vmatpush1.msra.mxu0 0.0
      %506 = vmatprep.subr.mxu0 0.0
      %507 = vmatpush1.msra.mxu0 0.0
      %508 = vmatprep.subr.mxu0 0.0
      %509 = vmatpush1.msra.mxu0 0.0
      %510 = vmatprep.subr.mxu0 0.0
      %511 = vmatpush1.msra.mxu0 0.0
      %512 = vmatprep.subr.mxu0 0.0
      %513 = vmatpush1.msra.mxu0 0.0
      %514 = vmatprep.subr.mxu0 0.0
      %515 = vmatpush1.msra.mxu0 0.0
      %516 = vmatprep.subr.mxu0 0.0
      %517 = vmatpush1.msra.mxu0 0.0
      %518 = vmatprep.subr.mxu0 0.0
      %519 = vmatpush1.msra.mxu0 0.0
      %520 = vmatprep.subr.mxu0 0.0
      %521 = vmatpush1.msra.mxu0 0.0
      %522 = vmatprep.mubr.f32.mxu0 0.0
      %523 = vmatmul.mubr.f32.gmra.mrb[0].mxu0 %v453
      %v524 = vpop.f32.mrb[0].mxu0
      %v525 = vadd.f32 0.0, %v524
      %v526 = vpop.f32.mrb[0].mxu0
      %527 = vmatprep.mubr.f32.mxu0 0.0
      %528 = vmatmul.mubr.f32.gmra.mrb[0].mxu0 %v456
      %v529 = vpop.f32.mrb[0].mxu0
      %v530 = vadd.f32 0.0, %v529
      %v531 = vpop.f32.mrb[0].mxu0
      %532 = vdwg.mxu0
      %v533 = vmul.f32 %v525, %v436
      %v534 = vmul.f32 %v530, %v437
      %v535 = vmul.f32 %v525, %v438
      %v536 = vmul.f32 %v530, %v439
      %v537 = vmul.f32 %v525, %v440
      %v538 = vmul.f32 %v530, %v441
      %v539 = vmul.f32 %v525, %v442
      %v540 = vmul.f32 %v530, %v443
      %v542 = vlaneseq
      %v543 = vshrl.u32 %v542, 7
      %v544 = vsub.s32 0, %v543
      %v545 = vrot.slane %v450, %v544
      %vm547 = vcmask 523264
      %v549 = vsel %vm547, %v434, 0
      %v552 = vsel %vm547, %v435, 0
      %554 = vmatprep.subr.mxu0 0.0
      %555 = vmatpush1.msra.mxu0 %v533
      %556 = vmatprep.subr.mxu0 0.0
      %557 = vmatpush1.msra.mxu0 %v534
      %558 = vmatprep.subr.mxu0 0.0
      %559 = vmatpush1.msra.mxu0 %v535
      %560 = vmatprep.subr.mxu0 0.0
      %561 = vmatpush1.msra.mxu0 %v536
      %562 = vmatprep.subr.mxu0 0.0
      %563 = vmatpush1.msra.mxu0 %v537
      %564 = vmatprep.subr.mxu0 0.0
      %565 = vmatpush1.msra.mxu0 %v538
      %566 = vmatprep.subr.mxu0 0.0
      %567 = vmatpush1.msra.mxu0 %v539
      %568 = vmatprep.subr.mxu0 0.0
      %569 = vmatpush1.msra.mxu0 %v540
      %570 = vmatprep.subr.mxu0 0.0
      %571 = vmatpush1.msra.mxu0 0.0
      %572 = vmatprep.subr.mxu0 0.0
      %573 = vmatpush1.msra.mxu0 0.0
      %574 = vmatprep.subr.mxu0 0.0
      %575 = vmatpush1.msra.mxu0 0.0
      %576 = vmatprep.subr.mxu0 0.0
      %577 = vmatpush1.msra.mxu0 0.0
      %578 = vmatprep.subr.mxu0 0.0
      %579 = vmatpush1.msra.mxu0 0.0
      %580 = vmatprep.subr.mxu0 0.0
      %581 = vmatpush1.msra.mxu0 0.0
      %582 = vmatprep.subr.mxu0 0.0
      %583 = vmatpush1.msra.mxu0 0.0
      %584 = vmatprep.subr.mxu0 0.0
      %585 = vmatpush1.msra.mxu0 0.0
      %586 = vmatprep.subr.mxu0 0.0
      %587 = vmatpush1.msra.mxu0 0.0
      %588 = vmatprep.subr.mxu0 0.0
      %589 = vmatpush1.msra.mxu0 0.0
      %590 = vmatprep.subr.mxu0 0.0
      %591 = vmatpush1.msra.mxu0 0.0
      %592 = vmatprep.subr.mxu0 0.0
      %593 = vmatpush1.msra.mxu0 0.0
      %594 = vmatprep.subr.mxu0 0.0
      %595 = vmatpush1.msra.mxu0 0.0
      %596 = vmatprep.subr.mxu0 0.0
      %597 = vmatpush1.msra.mxu0 0.0
      %598 = vmatprep.subr.mxu0 0.0
      %599 = vmatpush1.msra.mxu0 0.0
      %600 = vmatprep.subr.mxu0 0.0
      %601 = vmatpush1.msra.mxu0 0.0
      %602 = vmatprep.subr.mxu0 0.0
      %603 = vmatpush1.msra.mxu0 0.0
      %604 = vmatprep.subr.mxu0 0.0
      %605 = vmatpush1.msra.mxu0 0.0
      %606 = vmatprep.subr.mxu0 0.0
      %607 = vmatpush1.msra.mxu0 0.0
      %608 = vmatprep.subr.mxu0 0.0
      %609 = vmatpush1.msra.mxu0 0.0
      %610 = vmatprep.subr.mxu0 0.0
      %611 = vmatpush1.msra.mxu0 0.0
      %612 = vmatprep.subr.mxu0 0.0
      %613 = vmatpush1.msra.mxu0 0.0
      %614 = vmatprep.subr.mxu0 0.0
      %615 = vmatpush1.msra.mxu0 0.0
      %616 = vmatprep.subr.mxu0 0.0
      %617 = vmatpush1.msra.mxu0 0.0
      %618 = vmatprep.mubr.f32.mxu0 0.0
      %619 = vmatmul.mubr.f32.gmra.mrb[0].mxu0 %v549
      %v620 = vpop.f32.mrb[0].mxu0
      %v621 = vadd.f32 %v545, %v620
      %v622 = vpop.f32.mrb[0].mxu0
      %623 = vmatprep.mubr.f32.mxu0 0.0
      %624 = vmatmul.mubr.f32.gmra.mrb[0].mxu0 %v552
      %v625 = vpop.f32.mrb[0].mxu0
      %v626 = vadd.f32 %v545, %v625
      %v627 = vpop.f32.mrb[0].mxu0
      %628 = vdwg.mxu0
      %v629 = vmax.f32 %v621, 0.0
      %v630 = vmax.f32 %v626, 0.0
      %v631 = vld [vmem:[%s7] sm:$0xff]
      %v632 = vld [vmem:[%s7 + $0x8] sm:$0xff]
      %v633 = vld [vmem:[%s7 + $0x10] sm:$0xff]
      %v634 = vld [vmem:[%s7 + $0x18] sm:$0xff]
      %v635 = vld [vmem:[%s7 + $0x20] sm:$0xff]
      %v636 = vld [vmem:[%s7 + $0x28] sm:$0xff]
      %v637 = vld [vmem:[%s7 + $0x30] sm:$0xff]
      %v638 = vld [vmem:[%s7 + $0x38] sm:$0xff]
      %v639 = vld [vmem:[%s7 + $0x40] sm:$0xff]
      %v640 = vld [vmem:[%s7 + $0x48] sm:$0xff]
      %v641 = vld [vmem:[%s7 + $0x50] sm:$0xff]
      %v642 = vld [vmem:[%s7 + $0x58] sm:$0xff]
      %v643 = vld [vmem:[%s7 + $0x60] sm:$0xff]
      %v644 = vld [vmem:[%s7 + $0x68] sm:$0xff]
      %v645 = vld [vmem:[%s7 + $0x70] sm:$0xff]
      %v646 = vld [vmem:[%s7 + $0x78] sm:$0xff]
      %647 = vmatprep.subr.mxu0 0.0
      %648 = vmatpush1.msra.mxu0 %v631
      %649 = vmatprep.subr.mxu0 0.0
      %650 = vmatpush1.msra.mxu0 %v632
      %651 = vmatprep.subr.mxu0 0.0
      %652 = vmatpush1.msra.mxu0 %v633
      %653 = vmatprep.subr.mxu0 0.0
      %654 = vmatpush1.msra.mxu0 %v634
      %655 = vmatprep.subr.mxu0 0.0
      %656 = vmatpush1.msra.mxu0 %v635
      %657 = vmatprep.subr.mxu0 0.0
      %658 = vmatpush1.msra.mxu0 %v636
      %659 = vmatprep.subr.mxu0 0.0
      %660 = vmatpush1.msra.mxu0 %v637
      %661 = vmatprep.subr.mxu0 0.0
      %662 = vmatpush1.msra.mxu0 %v638
      %663 = vmatprep.subr.mxu0 0.0
      %664 = vmatpush1.msra.mxu0 %v639
      %665 = vmatprep.subr.mxu0 0.0
      %666 = vmatpush1.msra.mxu0 %v640
      %667 = vmatprep.subr.mxu0 0.0
      %668 = vmatpush1.msra.mxu0 %v641
      %669 = vmatprep.subr.mxu0 0.0
      %670 = vmatpush1.msra.mxu0 %v642
      %671 = vmatprep.subr.mxu0 0.0
      %672 = vmatpush1.msra.mxu0 %v643
      %673 = vmatprep.subr.mxu0 0.0
      %674 = vmatpush1.msra.mxu0 %v644
      %675 = vmatprep.subr.mxu0 0.0
      %676 = vmatpush1.msra.mxu0 %v645
      %677 = vmatprep.subr.mxu0 0.0
      %678 = vmatpush1.msra.mxu0 %v646
      %679 = vmatprep.subr.mxu0 0.0
      %680 = vmatpush1.msra.mxu0 0.0
      %681 = vmatprep.subr.mxu0 0.0
      %682 = vmatpush1.msra.mxu0 0.0
      %683 = vmatprep.subr.mxu0 0.0
      %684 = vmatpush1.msra.mxu0 0.0
      %685 = vmatprep.subr.mxu0 0.0
      %686 = vmatpush1.msra.mxu0 0.0
      %687 = vmatprep.subr.mxu0 0.0
      %688 = vmatpush1.msra.mxu0 0.0
      %689 = vmatprep.subr.mxu0 0.0
      %690 = vmatpush1.msra.mxu0 0.0
      %691 = vmatprep.subr.mxu0 0.0
      %692 = vmatpush1.msra.mxu0 0.0
      %693 = vmatprep.subr.mxu0 0.0
      %694 = vmatpush1.msra.mxu0 0.0
      %695 = vmatprep.subr.mxu0 0.0
      %696 = vmatpush1.msra.mxu0 0.0
      %697 = vmatprep.subr.mxu0 0.0
      %698 = vmatpush1.msra.mxu0 0.0
      %699 = vmatprep.subr.mxu0 0.0
      %700 = vmatpush1.msra.mxu0 0.0
      %701 = vmatprep.subr.mxu0 0.0
      %702 = vmatpush1.msra.mxu0 0.0
      %703 = vmatprep.subr.mxu0 0.0
      %704 = vmatpush1.msra.mxu0 0.0
      %705 = vmatprep.subr.mxu0 0.0
      %706 = vmatpush1.msra.mxu0 0.0
      %707 = vmatprep.subr.mxu0 0.0
      %708 = vmatpush1.msra.mxu0 0.0
      %709 = vmatprep.subr.mxu0 0.0
      %710 = vmatpush1.msra.mxu0 0.0
      %711 = vmatprep.mubr.f32.mxu0 0.0
      %712 = vmatmul.mubr.f32.gmra.mrb[0].mxu0 %v629
      %v713 = vpop.f32.mrb[0].mxu0
      %v714 = vadd.f32 0.0, %v713
      %v715 = vpop.f32.mrb[0].mxu0
      %716 = vmatprep.mubr.f32.mxu0 0.0
      %717 = vmatmul.mubr.f32.gmra.mrb[0].mxu0 %v630
      %v718 = vpop.f32.mrb[0].mxu0
      %v719 = vadd.f32 0.0, %v718
      %v720 = vpop.f32.mrb[0].mxu0
      %721 = vdwg.mxu0
      %vm722 = vcmask 31744
      %v723 = vsel %vm722, %v714, -inf
      %724 = vmax.xlane.f32.xlu0 %v723
      %v725 = vpop.xlane.xlu0 %724
      %v726 = vsel %vm722, %v719, -inf
      %727 = vmax.xlane.f32.xlu0 %v726
      %v728 = vpop.xlane.xlu0 %727
      %v729 = vsub.f32 %v714, %v725
      %v730 = vsub.f32 %v719, %v728
      %v731 = vmul.f32 %v729, 1.442695
      %v732 = vpow.pop %v731
      %v733 = vmul.f32 %v730, 1.442695
      %v734 = vpow.pop %v733
      %v735 = vsel %vm722, %v732, 0.0
      %736 = vadd.xlane.f32.xlu0 %v735
      %v737 = vpop.xlane.xlu0 %736
      %v738 = vsel %vm722, %v734, 0.0
      %739 = vadd.xlane.f32.xlu0 %v738
      %v740 = vpop.xlane.xlu0 %739
      %v741 = vrcp.pop %v737
      %v742 = vmul.f32 %v732, %v741
      %v743 = vrcp.pop %v740
      %v744 = vmul.f32 %v734, %v743
      %746 = vset.pattern.permute.xlu0 0
      %747 = vperm.xlu0 %746, %v742
      %v748 = vpop.permute.xlu0 %747
      %751 = vset.pattern.permute.xlu0 0
      %752 = vperm.xlu0 %751, %v744
      %v753 = vpop.permute.xlu0 %752
      %v755 = vmul.f32 %v748, %v629
      %v756 = vmul.f32 %v753, %v630
      %757 = vset.pattern.permute.xlu0 1
      %758 = vperm.xlu0 %757, %v742
      %v759 = vpop.permute.xlu0 %758
      %761 = vset.pattern.permute.xlu0 1
      %762 = vperm.xlu0 %761, %v744
      %v763 = vpop.permute.xlu0 %762
      %v765 = vmul.f32 %v759, %v629
      %v766 = vmul.f32 %v763, %v630
      %769 = vrot.lane.b32.xlu0 %v765, 96
      %v770 = vpop.permute.xlu0 %769
      %771 = vrot.lane.b32.xlu0 %v766, 96
      %v772 = vpop.permute.xlu0 %771
      %v775 = vadd.f32 %v755, %v770
      %v776 = vadd.f32 %v756, %v772
      %777 = vset.pattern.permute.xlu0 2
      %778 = vperm.xlu0 %777, %v742
      %v779 = vpop.permute.xlu0 %778
      %781 = vset.pattern.permute.xlu0 2
      %782 = vperm.xlu0 %781, %v744
      %v783 = vpop.permute.xlu0 %782
      %v785 = vmul.f32 %v779, %v629
      %v786 = vmul.f32 %v783, %v630
      %789 = vrot.lane.b32.xlu0 %v785, 64
      %v790 = vpop.permute.xlu0 %789
      %791 = vrot.lane.b32.xlu0 %v786, 64
      %v792 = vpop.permute.xlu0 %791
      %v795 = vadd.f32 %v775, %v790
      %v796 = vadd.f32 %v776, %v792
      %797 = vset.pattern.permute.xlu0 3
      %798 = vperm.xlu0 %797, %v742
      %v799 = vpop.permute.xlu0 %798
      %801 = vset.pattern.permute.xlu0 3
      %802 = vperm.xlu0 %801, %v744
      %v803 = vpop.permute.xlu0 %802
      %v805 = vmul.f32 %v799, %v629
      %v806 = vmul.f32 %v803, %v630
      %809 = vrot.lane.b32.xlu0 %v805, 32
      %v810 = vpop.permute.xlu0 %809
      %811 = vrot.lane.b32.xlu0 %v806, 32
      %v812 = vpop.permute.xlu0 %811
      %v815 = vadd.f32 %v795, %v810
      %v816 = vadd.f32 %v796, %v812
      %v817 = vld [vmem:[%s5] sm:$0xff]
      %v818 = vld [vmem:[%s5 + $0x8] sm:$0xff]
      %v819 = vld [vmem:[%s5 + $0x10] sm:$0xff]
      %v820 = vld [vmem:[%s5 + $0x18] sm:$0xff]
      %v821 = vld [vmem:[%s5 + $0x20] sm:$0xff]
      %v822 = vld [vmem:[%s5 + $0x28] sm:$0xff]
      %v823 = vld [vmem:[%s5 + $0x30] sm:$0xff]
      %v824 = vld [vmem:[%s5 + $0x38] sm:$0xff]
      %v825 = vld [vmem:[%s5 + $0x40] sm:$0xff]
      %v826 = vld [vmem:[%s5 + $0x48] sm:$0xff]
      %v827 = vld [vmem:[%s5 + $0x50] sm:$0xff]
      %v828 = vld [vmem:[%s5 + $0x58] sm:$0xff]
      %v829 = vld [vmem:[%s5 + $0x60] sm:$0xff]
      %v830 = vld [vmem:[%s5 + $0x68] sm:$0xff]
      %v831 = vld [vmem:[%s5 + $0x70] sm:$0xff]
      %v832 = vld [vmem:[%s5 + $0x78] sm:$0xff]
      %v833 = vld [vmem:[%s6] sm:$0x1]
      %834 = vmatprep.subr.mxu0 0.0
      %835 = vmatpush1.msra.mxu0 %v817
      %836 = vmatprep.subr.mxu0 0.0
      %837 = vmatpush1.msra.mxu0 %v818
      %838 = vmatprep.subr.mxu0 0.0
      %839 = vmatpush1.msra.mxu0 %v819
      %840 = vmatprep.subr.mxu0 0.0
      %841 = vmatpush1.msra.mxu0 %v820
      %842 = vmatprep.subr.mxu0 0.0
      %843 = vmatpush1.msra.mxu0 %v821
      %844 = vmatprep.subr.mxu0 0.0
      %845 = vmatpush1.msra.mxu0 %v822
      %846 = vmatprep.subr.mxu0 0.0
      %847 = vmatpush1.msra.mxu0 %v823
      %848 = vmatprep.subr.mxu0 0.0
      %849 = vmatpush1.msra.mxu0 %v824
      %850 = vmatprep.subr.mxu0 0.0
      %851 = vmatpush1.msra.mxu0 %v825
      %852 = vmatprep.subr.mxu0 0.0
      %853 = vmatpush1.msra.mxu0 %v826
      %854 = vmatprep.subr.mxu0 0.0
      %855 = vmatpush1.msra.mxu0 %v827
      %856 = vmatprep.subr.mxu0 0.0
      %857 = vmatpush1.msra.mxu0 %v828
      %858 = vmatprep.subr.mxu0 0.0
      %859 = vmatpush1.msra.mxu0 %v829
      %860 = vmatprep.subr.mxu0 0.0
      %861 = vmatpush1.msra.mxu0 %v830
      %862 = vmatprep.subr.mxu0 0.0
      %863 = vmatpush1.msra.mxu0 %v831
      %864 = vmatprep.subr.mxu0 0.0
      %865 = vmatpush1.msra.mxu0 %v832
      %866 = vmatprep.subr.mxu0 0.0
      %867 = vmatpush1.msra.mxu0 0.0
      %868 = vmatprep.subr.mxu0 0.0
      %869 = vmatpush1.msra.mxu0 0.0
      %870 = vmatprep.subr.mxu0 0.0
      %871 = vmatpush1.msra.mxu0 0.0
      %872 = vmatprep.subr.mxu0 0.0
      %873 = vmatpush1.msra.mxu0 0.0
      %874 = vmatprep.subr.mxu0 0.0
      %875 = vmatpush1.msra.mxu0 0.0
      %876 = vmatprep.subr.mxu0 0.0
      %877 = vmatpush1.msra.mxu0 0.0
      %878 = vmatprep.subr.mxu0 0.0
      %879 = vmatpush1.msra.mxu0 0.0
      %880 = vmatprep.subr.mxu0 0.0
      %881 = vmatpush1.msra.mxu0 0.0
      %882 = vmatprep.subr.mxu0 0.0
      %883 = vmatpush1.msra.mxu0 0.0
      %884 = vmatprep.subr.mxu0 0.0
      %885 = vmatpush1.msra.mxu0 0.0
      %886 = vmatprep.subr.mxu0 0.0
      %887 = vmatpush1.msra.mxu0 0.0
      %888 = vmatprep.subr.mxu0 0.0
      %889 = vmatpush1.msra.mxu0 0.0
      %890 = vmatprep.subr.mxu0 0.0
      %891 = vmatpush1.msra.mxu0 0.0
      %892 = vmatprep.subr.mxu0 0.0
      %893 = vmatpush1.msra.mxu0 0.0
      %894 = vmatprep.subr.mxu0 0.0
      %895 = vmatpush1.msra.mxu0 0.0
      %896 = vmatprep.subr.mxu0 0.0
      %897 = vmatpush1.msra.mxu0 0.0
      %898 = vmatprep.mubr.f32.mxu0 0.0
      %899 = vmatmul.mubr.f32.gmra.mrb[0].mxu0 %v629
      %v900 = vpop.f32.mrb[0].mxu0
      %v901 = vadd.f32 0.0, %v900
      %v902 = vpop.f32.mrb[0].mxu0
      %903 = vmatprep.mubr.f32.mxu0 0.0
      %904 = vmatmul.mubr.f32.gmra.mrb[0].mxu0 %v630
      %v905 = vpop.f32.mrb[0].mxu0
      %v906 = vadd.f32 0.0, %v905
      %v907 = vpop.f32.mrb[0].mxu0
      %908 = vdwg.mxu0
      %v909 = vmul.f32 %v901, %v436
      %v910 = vmul.f32 %v906, %v437
      %v911 = vmul.f32 %v901, %v438
      %v912 = vmul.f32 %v906, %v439
      %v913 = vmul.f32 %v901, %v440
      %v914 = vmul.f32 %v906, %v441
      %v915 = vmul.f32 %v901, %v442
      %v916 = vmul.f32 %v906, %v443
      %v918 = vlaneseq
      %v919 = vshrl.u32 %v918, 7
      %v920 = vsub.s32 0, %v919
      %v921 = vrot.slane %v833, %v920
      %923 = vmatprep.subr.mxu0 0.0
      %924 = vmatpush1.msra.mxu0 %v909
      %925 = vmatprep.subr.mxu0 0.0
      %926 = vmatpush1.msra.mxu0 %v910
      %927 = vmatprep.subr.mxu0 0.0
      %928 = vmatpush1.msra.mxu0 %v911
      %929 = vmatprep.subr.mxu0 0.0
      %930 = vmatpush1.msra.mxu0 %v912
      %931 = vmatprep.subr.mxu0 0.0
      %932 = vmatpush1.msra.mxu0 %v913
      %933 = vmatprep.subr.mxu0 0.0
      %934 = vmatpush1.msra.mxu0 %v914
      %935 = vmatprep.subr.mxu0 0.0
      %936 = vmatpush1.msra.mxu0 %v915
      %937 = vmatprep.subr.mxu0 0.0
      %938 = vmatpush1.msra.mxu0 %v916
      %939 = vmatprep.subr.mxu0 0.0
      %940 = vmatpush1.msra.mxu0 0.0
      %941 = vmatprep.subr.mxu0 0.0
      %942 = vmatpush1.msra.mxu0 0.0
      %943 = vmatprep.subr.mxu0 0.0
      %944 = vmatpush1.msra.mxu0 0.0
      %945 = vmatprep.subr.mxu0 0.0
      %946 = vmatpush1.msra.mxu0 0.0
      %947 = vmatprep.subr.mxu0 0.0
      %948 = vmatpush1.msra.mxu0 0.0
      %949 = vmatprep.subr.mxu0 0.0
      %950 = vmatpush1.msra.mxu0 0.0
      %951 = vmatprep.subr.mxu0 0.0
      %952 = vmatpush1.msra.mxu0 0.0
      %953 = vmatprep.subr.mxu0 0.0
      %954 = vmatpush1.msra.mxu0 0.0
      %955 = vmatprep.subr.mxu0 0.0
      %956 = vmatpush1.msra.mxu0 0.0
      %957 = vmatprep.subr.mxu0 0.0
      %958 = vmatpush1.msra.mxu0 0.0
      %959 = vmatprep.subr.mxu0 0.0
      %960 = vmatpush1.msra.mxu0 0.0
      %961 = vmatprep.subr.mxu0 0.0
      %962 = vmatpush1.msra.mxu0 0.0
      %963 = vmatprep.subr.mxu0 0.0
      %964 = vmatpush1.msra.mxu0 0.0
      %965 = vmatprep.subr.mxu0 0.0
      %966 = vmatpush1.msra.mxu0 0.0
      %967 = vmatprep.subr.mxu0 0.0
      %968 = vmatpush1.msra.mxu0 0.0
      %969 = vmatprep.subr.mxu0 0.0
      %970 = vmatpush1.msra.mxu0 0.0
      %971 = vmatprep.subr.mxu0 0.0
      %972 = vmatpush1.msra.mxu0 0.0
      %973 = vmatprep.subr.mxu0 0.0
      %974 = vmatpush1.msra.mxu0 0.0
      %975 = vmatprep.subr.mxu0 0.0
      %976 = vmatpush1.msra.mxu0 0.0
      %977 = vmatprep.subr.mxu0 0.0
      %978 = vmatpush1.msra.mxu0 0.0
      %979 = vmatprep.subr.mxu0 0.0
      %980 = vmatpush1.msra.mxu0 0.0
      %981 = vmatprep.subr.mxu0 0.0
      %982 = vmatpush1.msra.mxu0 0.0
      %983 = vmatprep.subr.mxu0 0.0
      %984 = vmatpush1.msra.mxu0 0.0
      %985 = vmatprep.subr.mxu0 0.0
      %986 = vmatpush1.msra.mxu0 0.0
      %987 = vmatprep.mubr.f32.mxu0 0.0
      %988 = vmatmul.mubr.f32.gmra.mrb[0].mxu0 %v549
      %v989 = vpop.f32.mrb[0].mxu0
      %v990 = vadd.f32 %v921, %v989
      %v991 = vpop.f32.mrb[0].mxu0
      %992 = vmatprep.mubr.f32.mxu0 0.0
      %993 = vmatmul.mubr.f32.gmra.mrb[0].mxu0 %v552
      %v994 = vpop.f32.mrb[0].mxu0
      %v995 = vadd.f32 %v921, %v994
      %v996 = vpop.f32.mrb[0].mxu0
      %997 = vdwg.mxu0
      %v998 = vmax.f32 %v990, 0.0
      %v999 = vmax.f32 %v995, 0.0
      %v1000 = vld [vmem:[%s8] sm:$0xff]
      %v1001 = vld [vmem:[%s8 + $0x8] sm:$0xff]
      %v1002 = vld [vmem:[%s8 + $0x10] sm:$0xff]
      %v1003 = vld [vmem:[%s8 + $0x18] sm:$0xff]
      %v1004 = vld [vmem:[%s8 + $0x20] sm:$0xff]
      %v1005 = vld [vmem:[%s8 + $0x28] sm:$0xff]
      %v1006 = vld [vmem:[%s8 + $0x30] sm:$0xff]
      %v1007 = vld [vmem:[%s8 + $0x38] sm:$0xff]
      %v1008 = vld [vmem:[%s8 + $0x40] sm:$0xff]
      %v1009 = vld [vmem:[%s8 + $0x48] sm:$0xff]
      %v1010 = vld [vmem:[%s8 + $0x50] sm:$0xff]
      %v1011 = vld [vmem:[%s8 + $0x58] sm:$0xff]
      %v1012 = vld [vmem:[%s8 + $0x60] sm:$0xff]
      %v1013 = vld [vmem:[%s8 + $0x68] sm:$0xff]
      %v1014 = vld [vmem:[%s8 + $0x70] sm:$0xff]
      %v1015 = vld [vmem:[%s8 + $0x78] sm:$0xff]
      %1016 = vmatprep.subr.mxu0 0.0
      %1017 = vmatpush1.msra.mxu0 %v1000
      %1018 = vmatprep.subr.mxu0 0.0
      %1019 = vmatpush1.msra.mxu0 %v1001
      %1020 = vmatprep.subr.mxu0 0.0
      %1021 = vmatpush1.msra.mxu0 %v1002
      %1022 = vmatprep.subr.mxu0 0.0
      %1023 = vmatpush1.msra.mxu0 %v1003
      %1024 = vmatprep.subr.mxu0 0.0
      %1025 = vmatpush1.msra.mxu0 %v1004
      %1026 = vmatprep.subr.mxu0 0.0
      %1027 = vmatpush1.msra.mxu0 %v1005
      %1028 = vmatprep.subr.mxu0 0.0
      %1029 = vmatpush1.msra.mxu0 %v1006
      %1030 = vmatprep.subr.mxu0 0.0
      %1031 = vmatpush1.msra.mxu0 %v1007
      %1032 = vmatprep.subr.mxu0 0.0
      %1033 = vmatpush1.msra.mxu0 %v1008
      %1034 = vmatprep.subr.mxu0 0.0
      %1035 = vmatpush1.msra.mxu0 %v1009
      %1036 = vmatprep.subr.mxu0 0.0
      %1037 = vmatpush1.msra.mxu0 %v1010
      %1038 = vmatprep.subr.mxu0 0.0
      %1039 = vmatpush1.msra.mxu0 %v1011
      %1040 = vmatprep.subr.mxu0 0.0
      %1041 = vmatpush1.msra.mxu0 %v1012
      %1042 = vmatprep.subr.mxu0 0.0
      %1043 = vmatpush1.msra.mxu0 %v1013
      %1044 = vmatprep.subr.mxu0 0.0
      %1045 = vmatpush1.msra.mxu0 %v1014
      %1046 = vmatprep.subr.mxu0 0.0
      %1047 = vmatpush1.msra.mxu0 %v1015
      %1048 = vmatprep.subr.mxu0 0.0
      %1049 = vmatpush1.msra.mxu0 0.0
      %1050 = vmatprep.subr.mxu0 0.0
      %1051 = vmatpush1.msra.mxu0 0.0
      %1052 = vmatprep.subr.mxu0 0.0
      %1053 = vmatpush1.msra.mxu0 0.0
      %1054 = vmatprep.subr.mxu0 0.0
      %1055 = vmatpush1.msra.mxu0 0.0
      %1056 = vmatprep.subr.mxu0 0.0
      %1057 = vmatpush1.msra.mxu0 0.0
      %1058 = vmatprep.subr.mxu0 0.0
      %1059 = vmatpush1.msra.mxu0 0.0
      %1060 = vmatprep.subr.mxu0 0.0
      %1061 = vmatpush1.msra.mxu0 0.0
      %1062 = vmatprep.subr.mxu0 0.0
      %1063 = vmatpush1.msra.mxu0 0.0
      %1064 = vmatprep.subr.mxu0 0.0
      %1065 = vmatpush1.msra.mxu0 0.0
      %1066 = vmatprep.subr.mxu0 0.0
      %1067 = vmatpush1.msra.mxu0 0.0
      %1068 = vmatprep.subr.mxu0 0.0
      %1069 = vmatpush1.msra.mxu0 0.0
      %1070 = vmatprep.subr.mxu0 0.0
      %1071 = vmatpush1.msra.mxu0 0.0
      %1072 = vmatprep.subr.mxu0 0.0
      %1073 = vmatpush1.msra.mxu0 0.0
      %1074 = vmatprep.subr.mxu0 0.0
      %1075 = vmatpush1.msra.mxu0 0.0
      %1076 = vmatprep.subr.mxu0 0.0
      %1077 = vmatpush1.msra.mxu0 0.0
      %1078 = vmatprep.subr.mxu0 0.0
      %1079 = vmatpush1.msra.mxu0 0.0
      %1080 = vmatprep.mubr.f32.mxu0 0.0
      %1081 = vmatmul.mubr.f32.gmra.mrb[0].mxu0 %v998
      %v1082 = vpop.f32.mrb[0].mxu0
      %v1083 = vadd.f32 0.0, %v1082
      %v1084 = vpop.f32.mrb[0].mxu0
      %1085 = vmatprep.mubr.f32.mxu0 0.0
      %1086 = vmatmul.mubr.f32.gmra.mrb[0].mxu0 %v999
      %v1087 = vpop.f32.mrb[0].mxu0
      %v1088 = vadd.f32 0.0, %v1087
      %v1089 = vpop.f32.mrb[0].mxu0
      %1090 = vdwg.mxu0
      %v1091 = vsel %vm722, %v1083, -inf
      %1092 = vmax.xlane.f32.xlu0 %v1091
      %v1093 = vpop.xlane.xlu0 %1092
      %v1094 = vsel %vm722, %v1088, -inf
      %1095 = vmax.xlane.f32.xlu0 %v1094
      %v1096 = vpop.xlane.xlu0 %1095
      %v1097 = vsub.f32 %v1083, %v1093
      %v1098 = vsub.f32 %v1088, %v1096
      %v1099 = vmul.f32 %v1097, 1.442695
      %v1100 = vpow.pop %v1099
      %v1101 = vmul.f32 %v1098, 1.442695
      %v1102 = vpow.pop %v1101
      %v1103 = vsel %vm722, %v1100, 0.0
      %1104 = vadd.xlane.f32.xlu0 %v1103
      %v1105 = vpop.xlane.xlu0 %1104
      %v1106 = vsel %vm722, %v1102, 0.0
      %1107 = vadd.xlane.f32.xlu0 %v1106
      %v1108 = vpop.xlane.xlu0 %1107
      %v1109 = vrcp.pop %v1105
      %v1110 = vmul.f32 %v1100, %v1109
      %v1111 = vrcp.pop %v1108
      %v1112 = vmul.f32 %v1102, %v1111
      %1114 = vset.pattern.permute.xlu0 0
      %1115 = vperm.xlu0 %1114, %v1110
      %v1116 = vpop.permute.xlu0 %1115
      %1119 = vset.pattern.permute.xlu0 0
      %1120 = vperm.xlu0 %1119, %v1112
      %v1121 = vpop.permute.xlu0 %1120
      %v1123 = vmul.f32 %v1116, %v998
      %v1124 = vmul.f32 %v1121, %v999
      %1125 = vset.pattern.permute.xlu0 1
      %1126 = vperm.xlu0 %1125, %v1110
      %v1127 = vpop.permute.xlu0 %1126
      %1129 = vset.pattern.permute.xlu0 1
      %1130 = vperm.xlu0 %1129, %v1112
      %v1131 = vpop.permute.xlu0 %1130
      %v1133 = vmul.f32 %v1127, %v998
      %v1134 = vmul.f32 %v1131, %v999
      %1137 = vrot.lane.b32.xlu0 %v1133, 96
      %v1138 = vpop.permute.xlu0 %1137
      %1139 = vrot.lane.b32.xlu0 %v1134, 96
      %v1140 = vpop.permute.xlu0 %1139
      %v1143 = vadd.f32 %v1123, %v1138
      %v1144 = vadd.f32 %v1124, %v1140
      %1145 = vset.pattern.permute.xlu0 2
      %1146 = vperm.xlu0 %1145, %v1110
      %v1147 = vpop.permute.xlu0 %1146
      %1149 = vset.pattern.permute.xlu0 2
      %1150 = vperm.xlu0 %1149, %v1112
      %v1151 = vpop.permute.xlu0 %1150
      %v1153 = vmul.f32 %v1147, %v998
      %v1154 = vmul.f32 %v1151, %v999
      %1157 = vrot.lane.b32.xlu0 %v1153, 64
      %v1158 = vpop.permute.xlu0 %1157
      %1159 = vrot.lane.b32.xlu0 %v1154, 64
      %v1160 = vpop.permute.xlu0 %1159
      %v1163 = vadd.f32 %v1143, %v1158
      %v1164 = vadd.f32 %v1144, %v1160
      %1165 = vset.pattern.permute.xlu0 3
      %1166 = vperm.xlu0 %1165, %v1110
      %v1167 = vpop.permute.xlu0 %1166
      %1169 = vset.pattern.permute.xlu0 3
      %1170 = vperm.xlu0 %1169, %v1112
      %v1171 = vpop.permute.xlu0 %1170
      %v1173 = vmul.f32 %v1167, %v998
      %v1174 = vmul.f32 %v1171, %v999
      %1177 = vrot.lane.b32.xlu0 %v1173, 32
      %v1178 = vpop.permute.xlu0 %1177
      %1179 = vrot.lane.b32.xlu0 %v1174, 32
      %v1180 = vpop.permute.xlu0 %1179
      %v1183 = vadd.f32 %v1163, %v1178
      %v1184 = vadd.f32 %v1164, %v1180
      %v1185 = vld [vmem:[%s9] sm:$0xff]
      %v1186 = vld [vmem:[%s9 + $0x8] sm:$0xff]
      %v1187 = vld [vmem:[%s9 + $0x10] sm:$0xff]
      %v1188 = vld [vmem:[%s9 + $0x18] sm:$0xff]
      %v1189 = vld [vmem:[%s10] sm:$0xff]
      %v1190 = vld [vmem:[%s10 + $0x8] sm:$0xff]
      %v1191 = vld [vmem:[%s10 + $0x10] sm:$0xff]
      %v1192 = vld [vmem:[%s10 + $0x18] sm:$0xff]
      %v1194 = vsel %vm451, %v1183, 0
      %v1197 = vsel %vm451, %v1184, 0
      %1199 = vmatprep.subr.mxu0 0.0
      %1200 = vmatpush1.msra.mxu0 %v1189
      %1201 = vmatprep.subr.mxu0 0.0
      %1202 = vmatpush1.msra.mxu0 %v1190
      %1203 = vmatprep.subr.mxu0 0.0
      %1204 = vmatpush1.msra.mxu0 %v1191
      %1205 = vmatprep.subr.mxu0 0.0
      %1206 = vmatpush1.msra.mxu0 %v1192
      %1207 = vmatprep.subr.mxu0 0.0
      %1208 = vmatpush1.msra.mxu0 0.0
      %1209 = vmatprep.subr.mxu0 0.0
      %1210 = vmatpush1.msra.mxu0 0.0
      %1211 = vmatprep.subr.mxu0 0.0
      %1212 = vmatpush1.msra.mxu0 0.0
      %1213 = vmatprep.subr.mxu0 0.0
      %1214 = vmatpush1.msra.mxu0 0.0
      %1215 = vmatprep.subr.mxu0 0.0
      %1216 = vmatpush1.msra.mxu0 0.0
      %1217 = vmatprep.subr.mxu0 0.0
      %1218 = vmatpush1.msra.mxu0 0.0
      %1219 = vmatprep.subr.mxu0 0.0
      %1220 = vmatpush1.msra.mxu0 0.0
      %1221 = vmatprep.subr.mxu0 0.0
      %1222 = vmatpush1.msra.mxu0 0.0
      %1223 = vmatprep.subr.mxu0 0.0
      %1224 = vmatpush1.msra.mxu0 0.0
      %1225 = vmatprep.subr.mxu0 0.0
      %1226 = vmatpush1.msra.mxu0 0.0
      %1227 = vmatprep.subr.mxu0 0.0
      %1228 = vmatpush1.msra.mxu0 0.0
      %1229 = vmatprep.subr.mxu0 0.0
      %1230 = vmatpush1.msra.mxu0 0.0
      %1231 = vmatprep.subr.mxu0 0.0
      %1232 = vmatpush1.msra.mxu0 0.0
      %1233 = vmatprep.subr.mxu0 0.0
      %1234 = vmatpush1.msra.mxu0 0.0
      %1235 = vmatprep.subr.mxu0 0.0
      %1236 = vmatpush1.msra.mxu0 0.0
      %1237 = vmatprep.subr.mxu0 0.0
      %1238 = vmatpush1.msra.mxu0 0.0
      %1239 = vmatprep.subr.mxu0 0.0
      %1240 = vmatpush1.msra.mxu0 0.0
      %1241 = vmatprep.subr.mxu0 0.0
      %1242 = vmatpush1.msra.mxu0 0.0
      %1243 = vmatprep.subr.mxu0 0.0
      %1244 = vmatpush1.msra.mxu0 0.0
      %1245 = vmatprep.subr.mxu0 0.0
      %1246 = vmatpush1.msra.mxu0 0.0
      %1247 = vmatprep.subr.mxu0 0.0
      %1248 = vmatpush1.msra.mxu0 0.0
      %1249 = vmatprep.subr.mxu0 0.0
      %1250 = vmatpush1.msra.mxu0 0.0
      %1251 = vmatprep.subr.mxu0 0.0
      %1252 = vmatpush1.msra.mxu0 0.0
      %1253 = vmatprep.subr.mxu0 0.0
      %1254 = vmatpush1.msra.mxu0 0.0
      %1255 = vmatprep.subr.mxu0 0.0
      %1256 = vmatpush1.msra.mxu0 0.0
      %1257 = vmatprep.subr.mxu0 0.0
      %1258 = vmatpush1.msra.mxu0 0.0
      %1259 = vmatprep.subr.mxu0 0.0
      %1260 = vmatpush1.msra.mxu0 0.0
      %1261 = vmatprep.subr.mxu0 0.0
      %1262 = vmatpush1.msra.mxu0 0.0
      %1263 = vmatprep.mubr.f32.mxu0 0.0
      %1264 = vmatmul.mubr.f32.gmra.mrb[0].mxu0 %v1194
      %v1265 = vpop.f32.mrb[0].mxu0
      %v1266 = vadd.f32 0.0, %v1265
      %v1267 = vpop.f32.mrb[0].mxu0
      %1268 = vmatprep.mubr.f32.mxu0 0.0
      %1269 = vmatmul.mubr.f32.gmra.mrb[0].mxu0 %v1197
      %v1270 = vpop.f32.mrb[0].mxu0
      %v1271 = vadd.f32 0.0, %v1270
      %v1272 = vpop.f32.mrb[0].mxu0
      %1273 = vdwg.mxu0
      %v1275 = vsel %vm451, %v815, 0
      %v1278 = vsel %vm451, %v816, 0
      %1280 = vmatprep.subr.mxu0 0.0
      %1281 = vmatpush1.msra.mxu0 %v1185
      %1282 = vmatprep.subr.mxu0 0.0
      %1283 = vmatpush1.msra.mxu0 %v1186
      %1284 = vmatprep.subr.mxu0 0.0
      %1285 = vmatpush1.msra.mxu0 %v1187
      %1286 = vmatprep.subr.mxu0 0.0
      %1287 = vmatpush1.msra.mxu0 %v1188
      %1288 = vmatprep.subr.mxu0 0.0
      %1289 = vmatpush1.msra.mxu0 0.0
      %1290 = vmatprep.subr.mxu0 0.0
      %1291 = vmatpush1.msra.mxu0 0.0
      %1292 = vmatprep.subr.mxu0 0.0
      %1293 = vmatpush1.msra.mxu0 0.0
      %1294 = vmatprep.subr.mxu0 0.0
      %1295 = vmatpush1.msra.mxu0 0.0
      %1296 = vmatprep.subr.mxu0 0.0
      %1297 = vmatpush1.msra.mxu0 0.0
      %1298 = vmatprep.subr.mxu0 0.0
      %1299 = vmatpush1.msra.mxu0 0.0
      %1300 = vmatprep.subr.mxu0 0.0
      %1301 = vmatpush1.msra.mxu0 0.0
      %1302 = vmatprep.subr.mxu0 0.0
      %1303 = vmatpush1.msra.mxu0 0.0
      %1304 = vmatprep.subr.mxu0 0.0
      %1305 = vmatpush1.msra.mxu0 0.0
      %1306 = vmatprep.subr.mxu0 0.0
      %1307 = vmatpush1.msra.mxu0 0.0
      %1308 = vmatprep.subr.mxu0 0.0
      %1309 = vmatpush1.msra.mxu0 0.0
      %1310 = vmatprep.subr.mxu0 0.0
      %1311 = vmatpush1.msra.mxu0 0.0
      %1312 = vmatprep.subr.mxu0 0.0
      %1313 = vmatpush1.msra.mxu0 0.0
      %1314 = vmatprep.subr.mxu0 0.0
      %1315 = vmatpush1.msra.mxu0 0.0
      %1316 = vmatprep.subr.mxu0 0.0
      %1317 = vmatpush1.msra.mxu0 0.0
      %1318 = vmatprep.subr.mxu0 0.0
      %1319 = vmatpush1.msra.mxu0 0.0
      %1320 = vmatprep.subr.mxu0 0.0
      %1321 = vmatpush1.msra.mxu0 0.0
      %1322 = vmatprep.subr.mxu0 0.0
      %1323 = vmatpush1.msra.mxu0 0.0
      %1324 = vmatprep.subr.mxu0 0.0
      %1325 = vmatpush1.msra.mxu0 0.0
      %1326 = vmatprep.subr.mxu0 0.0
      %1327 = vmatpush1.msra.mxu0 0.0
      %1328 = vmatprep.subr.mxu0 0.0
      %1329 = vmatpush1.msra.mxu0 0.0
      %1330 = vmatprep.subr.mxu0 0.0
      %1331 = vmatpush1.msra.mxu0 0.0
      %1332 = vmatprep.subr.mxu0 0.0
      %1333 = vmatpush1.msra.mxu0 0.0
      %1334 = vmatprep.subr.mxu0 0.0
      %1335 = vmatpush1.msra.mxu0 0.0
      %1336 = vmatprep.subr.mxu0 0.0
      %1337 = vmatpush1.msra.mxu0 0.0
      %1338 = vmatprep.subr.mxu0 0.0
      %1339 = vmatpush1.msra.mxu0 0.0
      %1340 = vmatprep.subr.mxu0 0.0
      %1341 = vmatpush1.msra.mxu0 0.0
      %1342 = vmatprep.subr.mxu0 0.0
      %1343 = vmatpush1.msra.mxu0 0.0
      %1344 = vmatprep.mubr.f32.mxu0 0.0
      %1345 = vmatmul.mubr.f32.gmra.mrb[0].mxu0 %v1275
      %v1346 = vpop.f32.mrb[0].mxu0
      %v1347 = vadd.f32 %v1266, %v1346
      %v1348 = vpop.f32.mrb[0].mxu0
      %1349 = vmatprep.mubr.f32.mxu0 0.0
      %1350 = vmatmul.mubr.f32.gmra.mrb[0].mxu0 %v1278
      %v1351 = vpop.f32.mrb[0].mxu0
      %v1352 = vadd.f32 %v1271, %v1351
      %v1353 = vpop.f32.mrb[0].mxu0
      %1354 = vdwg.mxu0
      %v1355 = vld [vmem:[%s11] sm:$0x1]
      %v1357 = vlaneseq
      %v1358 = vshrl.u32 %v1357, 7
      %v1359 = vsub.s32 0, %v1358
      %v1360 = vrot.slane %v1355, %v1359
      %v1362 = vadd.f32 %v1347, %v1360
      %v1363 = vadd.f32 %v1352, %v1360
      %v1364 = vsel %vm722, %v1362, -inf
      %1365 = vmax.xlane.f32.xlu0 %v1364
      %v1366 = vpop.xlane.xlu0 %1365
      %v1367 = vsel %vm722, %v1363, -inf
      %1368 = vmax.xlane.f32.xlu0 %v1367
      %v1369 = vpop.xlane.xlu0 %1368
      %v1370 = vsub.f32 %v1362, %v1366
      %v1371 = vsub.f32 %v1363, %v1369
      %v1372 = vmul.f32 %v1370, 1.442695
      %v1373 = vpow.pop %v1372
      %v1374 = vmul.f32 %v1371, 1.442695
      %v1375 = vpow.pop %v1374
      %v1376 = vsel %vm722, %v1373, 0.0
      %1377 = vadd.xlane.f32.xlu0 %v1376
      %v1378 = vpop.xlane.xlu0 %1377
      %v1379 = vsel %vm722, %v1375, 0.0
      %1380 = vadd.xlane.f32.xlu0 %v1379
      %v1381 = vpop.xlane.xlu0 %1380
      %v1382 = vlog2.pop %v1378
      %v1383 = vmul.f32 %v1382, 0.6931472
      %v1384 = vlog2.pop %v1381
      %v1385 = vmul.f32 %v1384, 0.6931472
      %v1386 = vadd.f32 %v1383, %v1366
      %v1387 = vadd.f32 %v1385, %v1369
      %v1388 = vsub.f32 %v1362, %v1386
      %v1389 = vsub.f32 %v1363, %v1387
      %1390 = vst.msk [vmem:[%s433] sm:$0xff] %vm722, %v1388
      %1391 = vst.msk [vmem:[%s433 + $0x8] sm:$0xff] %vm722, %v1389
      %p1392 = scmp.lt.s32.totalorder %s23, 7
      %s1393 = scalar_select %p1392, %s23, 7
      %s1394 = smul.addr %s1393, 2
      %s1395 = smul.addr %s1394, 8
      %s1396 = scalar_lea.vmem %s12, %s1395
      // Predicated region
      $region69: #{mhgcn_forward.1} parent=67 // pred_check
        %p1397 = pneg %p303
      $region70: #{mhgcn_forward.1} parent=67 // pred_check_branch
        %1399 = sbr.rel (%p1397) target = $region72
      $region71: #{mhgcn_forward.1} parent=67 // pred_region
        _
      $region72: #{mhgcn_forward.1} parent=67 // pred_fallthru
        _
    $region68: #{mhgcn_forward.1} parent=5 // pred_fallthru
      _
    %p1400 = scmp.le.s32.totalorder 2, %s18
    // Predicated region
    $region73: #{mhgcn_forward.1} parent=5 // pred_check
      %p1401 = pneg %p1400
    $region74: #{mhgcn_forward.1} parent=5 // pred_check_branch
      %1403 = sbr.rel (%p1401) target = $region76
    $region75: #{mhgcn_forward.1} parent=5 // pred_region
      %s1404 = ssub.s32 %s18, 2
      // Predicated region
      $region77: #{mhgcn_forward.1} parent=75 // pred_check
        %p1405 = pneg %p309
      $region78: #{mhgcn_forward.1} parent=75 // pred_check_branch
        %1407 = sbr.rel (%p1405) target = $region80
      $region79: #{mhgcn_forward.1} parent=75 // pred_region
        %p1408 = scmp.lt.s32.totalorder %s24, 7
        %s1409 = scalar_select %p1408, %s24, 7
        %s1410 = smul.addr %s1409, 2
        %s1411 = smul.addr %s1410, 8
        %s1412 = scalar_lea.vmem %s12, %s1411
      $region80: #{mhgcn_forward.1} parent=75 // pred_fallthru
        _
    $region76: #{mhgcn_forward.1} parent=5 // pred_fallthru
      _
  $region6: #{mhgcn_forward.1} parent=0 // loop_footer
    %s22 = sadd.s32 1, %s18
  $region7: #{mhgcn_forward.1} parent=0 // loop_footer_branch
    %17 = sbr.rel target = $region3
  $region8: #{mhgcn_forward.1} parent=0 // loop_exit
    _

</llo_original>
